<compile_context>
chip_gen: v7x
topology: tpu7x:2x2x1
jax: 0.10.0
libtpu: 0.0.40
codegen_flags: <defaults>
</compile_context>

<pallas_src>
import math
import functools

import jax
import jax.numpy as jnp
import numpy as np
from jax import lax
from jax.experimental import pallas as pl
from jax.experimental.pallas import tpu as pltpu


# ---------------------------------------------------------------------------
# Fused per-graph kernel body (one grid step == one graph)
# ---------------------------------------------------------------------------
def _sscgcn_kernel(
    thetas_ref,                        # SMEM (nlayers,) f32     [scalar prefetch]
    x_in_ref,                          # VMEM (n, kx+kl)         cat([fxyz, flam], 1)
    fstk_ref,                          # VMEM (2n, kx+kl)        [[fxyz, 0], [0, flam]]
    adjp_ref,                          # VMEM (n, 2n)            [lamadj | xyzadj]
    satt_ref,                          # VMEM (n, n)             sigmoid(att_w)
    w_in_ref, b_in_ref,                # VMEM (kx+kl, f), (1, f)
    w_sub_ref,                         # VMEM (kx+kl, f)         zero-padded stack
    w_full_ref,                        # VMEM (L, 2f, f)         original conv weights
    w_out_ref, b_out_ref,              # VMEM (f, c), (1, c)
    o_ref,                             # VMEM (n, c)
    hh_scr,                            # VMEM scratch (n, 2f)    [hi | h0]
    *, alpha, nlayers, n, f):
    f32 = jnp.float32
    relu = lambda v: jnp.maximum(v, 0.0)
    cdt = hh_scr.dtype                 # compute dtype of matmul inputs

    # --- fcs[2]: relu(cat([fxyz, flam], 1) @ W_in + b) -- single K=(kx+kl) dot
    x = relu(jnp.dot(x_in_ref[...], w_in_ref[...],
                     preferred_element_type=f32) + b_in_ref[...])

    # --- Adjattention: adj = s*xyzadj + (1-s)*lamadj  (s precomputed in wrapper)
    adjp = adjp_ref[...]               # [lamadj | xyzadj]
    lamadj = adjp[:, :n].astype(f32)
    xyzadj = adjp[:, n:].astype(f32)
    s = satt_ref[...].astype(f32)
    adj = s * xyzadj + (1.0 - s) * lamadj
    adj_c = adj.astype(cdt)            # hoisted, reused every layer

    # --- SubGraphConvolutions, fully fused:
    #   sup  = [[fxyz,0],[0,flam]] @ [[Wsx|0];[0|Wsl]]  -> [sup_xyz ; sup_lam]
    #   h0   = relu([lamadj | xyzadj] @ sup)            (single K=2n dot; exact,
    #          zero-padded weights keep the two halves separated)
    sup = jnp.dot(fstk_ref[...], w_sub_ref[...], preferred_element_type=f32)
    h0 = relu(jnp.dot(adjp, sup.astype(cdt), preferred_element_type=f32))

    # h0 half of the packed [hi | h0] buffer: written once per graph.
    hh_scr[:, f:] = h0.astype(cdt)

    # --- MainGraphConvolution layer loop: one K=2f dot per layer.
    def layer_body(l, x):
        theta = thetas_ref[l]
        hi = jnp.dot(adj_c, x.astype(cdt), preferred_element_type=f32)
        hh_scr[:, :f] = hi.astype(cdt)
        # support = cat([hi, h0], 1) @ W  ==  hh @ W_full[l]
        sw = jnp.dot(hh_scr[...], w_full_ref[l], preferred_element_type=f32)
        r = (1.0 - alpha) * hi + alpha * h0
        return relu(theta * sw + (1.0 - theta) * r)

    x = lax.fori_loop(0, nlayers, layer_body, x, unroll=True)

    # --- fcs[3] + log_softmax(dim=1)
    logits = jnp.dot(x.astype(cdt), w_out_ref[...],
                     preferred_element_type=f32) + b_out_ref[...]
    m = jnp.max(logits, axis=-1, keepdims=True)
    lse = jnp.log(jnp.sum(jnp.exp(logits - m), axis=-1, keepdims=True)) + m
    o_ref[...] = (logits - lse).astype(o_ref.dtype)


# ---------------------------------------------------------------------------
# Wrapper: parameter/input prep + batched pallas_call
# ---------------------------------------------------------------------------
def sscgcn_forward(params, featurexyz, featurelamda, xyzadj, lamdaadj,
                   *, t, alpha, compute_dtype=jnp.float32):
    """Batched forward: all per-graph inputs have a leading batch dim B."""
    B, n, kx = featurexyz.shape
    kl = featurelamda.shape[2]
    kfeat = kx + kl
    f = params["fc_in_w"].shape[1]       # 2 * nhidden
    h = params["sub_xyz_w"].shape[1]     # nhidden
    c = params["fc_out_w"].shape[1]
    nlayers = len(params["conv_ws"])
    # The concat-elimination tricks assume f == 2*nhidden (true by construction).
    assert f == 2 * h, "fc_in output width must equal 2*nhidden"
    assert params["conv_ws"][0].shape == (2 * f, f)
    cdt = compute_dtype

    # ---- parameters (preprocessing amortized across calls) ----
    w_in = params["fc_in_w"].astype(cdt)                       # (kfeat, f)
    b_in = params["fc_in_b"].reshape(1, f).astype(jnp.float32)
    # zero-padded, stacked sub-conv weight: [[Wsx | 0]; [0 | Wsl]]  -> (kfeat, f)
    w_sub = jnp.zeros((kfeat, f), jnp.float32)
    w_sub = w_sub.at[:kx, :h].set(params["sub_xyz_w"])
    w_sub = w_sub.at[kx:, h:].set(params["sub_lamda_w"])
    w_sub = w_sub.astype(cdt)
    # MainGCN weights already (2f, f) with rows [W_hi; W_h0] -> stack over layers.
    w_full = jnp.stack(params["conv_ws"]).astype(cdt)          # (L, 2f, f)
    w_out = params["fc_out_w"].astype(cdt)
    b_out = params["fc_out_b"].reshape(1, c).astype(jnp.float32)
    s_att = jax.nn.sigmoid(params["att_w"]).astype(cdt)        # (n, n)
    thetas = jnp.array([math.log(t / (l + 1) + 1.0) for l in range(nlayers)],
                       jnp.float32)

    # ---- per-graph inputs (cheap one-time XLA concats) ----
    x_in = jnp.concatenate([featurexyz, featurelamda], axis=-1).astype(cdt)
    f_top = jnp.concatenate(
        [featurexyz, jnp.zeros_like(featurelamda)], axis=-1)
    f_bot = jnp.concatenate(
        [jnp.zeros_like(featurexyz), featurelamda], axis=-1)
    f_stack = jnp.concatenate([f_top, f_bot], axis=-2).astype(cdt)  # (B, 2n, kfeat)
    adj_pair = jnp.concatenate([lamdaadj, xyzadj], axis=-1).astype(cdt)  # (B, n, 2n)

    per_graph = lambda blk: pl.BlockSpec(blk, lambda b, *_: (b,) + (0,) * (len(blk) - 1))
    shared2 = lambda blk: pl.BlockSpec(blk, lambda b, *_: (0,) * len(blk))

    grid_spec = pltpu.PrefetchScalarGridSpec(
        num_scalar_prefetch=1,
        grid=(B,),
        in_specs=[
            per_graph((None, n, kfeat)),        # x_in
            per_graph((None, 2 * n, kfeat)),    # f_stack
            per_graph((None, n, 2 * n)),        # adj_pair
            shared2((n, n)),                    # s_att
            shared2((kfeat, f)),                # w_in
            shared2((1, f)),                    # b_in
            shared2((kfeat, f)),                # w_sub
            shared2((nlayers, 2 * f, f)),       # w_full
            shared2((f, c)),                    # w_out
            shared2((1, c)),                    # b_out
        ],
        out_specs=per_graph((None, n, c)),
        scratch_shapes=[pltpu.VMEM((n, 2 * f), cdt)],          # hh = [hi | h0]
    )

    return pl.pallas_call(
        functools.partial(_sscgcn_kernel, alpha=float(alpha),
                          nlayers=nlayers, n=n, f=f),
        out_shape=jax.ShapeDtypeStruct((B, n, c), jnp.float32),
        grid_spec=grid_spec,
        compiler_params=pltpu.CompilerParams(
            dimension_semantics=("parallel",),        # both TCs on v7x
            vmem_limit_bytes=32 * 1024 * 1024),       # explicit (v5e default is 16 MiB)
    )(thetas, x_in, f_stack, adj_pair, s_att,
      w_in, b_in, w_sub, w_full, w_out, b_out)


# ---------------------------------------------------------------------------
# Pure-JAX single-graph reference for correctness checking
# ---------------------------------------------------------------------------
def sscgcn_reference(params, featurexyz, featurelamda, xyzadj, lamdaadj, *, t, alpha):
    relu = lambda v: jnp.maximum(v, 0.0)
    x = jnp.concatenate([featurexyz, featurelamda], axis=1)
    layer_inner = relu(x @ params["fc_in_w"] + params["fc_in_b"])
    w_att = jax.nn.sigmoid(params["att_w"])
    adj = w_att * xyzadj + (1.0 - w_att) * lamdaadj
    rxyz = relu(lamdaadj @ (featurexyz @ params["sub_xyz_w"]))
    rlamda = relu(xyzadj @ (featurelamda @ params["sub_lamda_w"]))
    h0 = jnp.concatenate([rxyz, rlamda], axis=1)
    for layer_idx, w in enumerate(params["conv_ws"], start=1):
        theta = math.log(t / layer_idx + 1.0)
        hi = adj @ layer_inner
        support = jnp.concatenate([hi, h0], axis=1)
        r = (1.0 - alpha) * hi + alpha * h0
        layer_inner = relu(theta * (support @ w) + (1.0 - theta) * r)
    logits = layer_inner @ params["fc_out_w"] + params["fc_out_b"]
    return jax.nn.log_softmax(logits, axis=1)


if __name__ == "__main__":
    # Small, module-consistent shapes; B graphs run through one pallas_call grid.
    B = 2
    npoint = 128
    nfeatxyz, nfeatlamda = 8, 8
    nhidden, nclass, nlayers = 32, 8, 2
    lamda_t, alpha = 0.5, 0.1
    nfeat = nfeatxyz + nfeatlamda

    key = jax.random.PRNGKey(0)
    ks = jax.random.split(key, 12)

    def u(k, shape, lo, hi):
        return jax.random.uniform(k, shape, jnp.float32, lo, hi)

    stdv_lin_in = 1.0 / math.sqrt(nfeat)
    stdv_lin_out = 1.0 / math.sqrt(2 * nhidden)
    stdv_sub = 1.0 / math.sqrt(nhidden)
    stdv_main = 1.0 / math.sqrt(2 * nhidden)

    params = {
        # fcs[2]: Linear(nfeat -> 2*nhidden), stored as [in, out]
        "fc_in_w": u(ks[0], (nfeat, 2 * nhidden), -stdv_lin_in, stdv_lin_in),
        "fc_in_b": u(ks[1], (2 * nhidden,), -stdv_lin_in, stdv_lin_in),
        # fcs[3]: Linear(2*nhidden -> nclass)
        "fc_out_w": u(ks[2], (2 * nhidden, nclass), -stdv_lin_out, stdv_lin_out),
        "fc_out_b": u(ks[3], (nclass,), -stdv_lin_out, stdv_lin_out),
        # fcs[0], fcs[1]: SubGraphConvolution weights
        "sub_xyz_w": u(ks[4], (nfeatxyz, nhidden), -stdv_sub, stdv_sub),
        "sub_lamda_w": u(ks[5], (nfeatlamda, nhidden), -stdv_sub, stdv_sub),
        # MainGraphConvolution weights: [4*nhidden, 2*nhidden] per layer
        "conv_ws": [
            u(ks[6 + i], (4 * nhidden, 2 * nhidden), -stdv_main, stdv_main)
            for i in range(nlayers)
        ],
        # Adjattention weight: uniform(0, 1)
        "att_w": u(ks[8], (npoint, npoint), 0.0, 1.0),
    }

    featurexyz = jax.random.normal(ks[9], (B, npoint, nfeatxyz), jnp.float32)
    featurelamda = jax.random.normal(ks[10], (B, npoint, nfeatlamda), jnp.float32)
    k_a1, k_a2 = jax.random.split(ks[11])
    xyzadj = u(k_a1, (B, npoint, npoint), 0.0, 1.0) / npoint
    lamdaadj = u(k_a2, (B, npoint, npoint), 0.0, 1.0) / npoint

    # --- exact f32 path ---
    out_f32 = sscgcn_forward(params, featurexyz, featurelamda, xyzadj, lamdaadj,
                             t=lamda_t, alpha=alpha, compute_dtype=jnp.float32)
    out_f32 = jax.block_until_ready(out_f32)

    ref = jnp.stack([
        sscgcn_reference(params, featurexyz[b], featurelamda[b],
                         xyzadj[b], lamdaadj[b], t=lamda_t, alpha=alpha)
        for b in range(B)
    ])
    np.testing.assert_allclose(np.asarray(out_f32), np.asarray(ref),
                               rtol=1e-4, atol=1e-4)

    # --- bf16 matmul-input path (f32 accumulation), looser tolerance ---
    out_bf16 = sscgcn_forward(params, featurexyz, featurelamda, xyzadj, lamdaadj,
                              t=lamda_t, alpha=alpha, compute_dtype=jnp.bfloat16)
    out_bf16 = jax.block_until_ready(out_bf16)
    np.testing.assert_allclose(np.asarray(out_bf16), np.asarray(ref),
                               rtol=5e-2, atol=5e-2)

    assert out_f32.shape == (B, npoint, nclass)
    print("KERNEL_OK")
</pallas_src>

<mosaic_0001>
module attributes {stable_mosaic.version = 11 : i64} {
  func.func @_sscgcn_kernel(%arg0: i32, %arg1: memref<2xf32, #tpu.memory_space<smem>>, %arg2: memref<1x128x16xf32, #tpu.memory_space<vmem>>, %arg3: memref<1x256x16xf32, #tpu.memory_space<vmem>>, %arg4: memref<1x128x256xf32, #tpu.memory_space<vmem>>, %arg5: memref<128x128xf32, #tpu.memory_space<vmem>>, %arg6: memref<16x64xf32, #tpu.memory_space<vmem>>, %arg7: memref<1x64xf32, #tpu.memory_space<vmem>>, %arg8: memref<16x64xf32, #tpu.memory_space<vmem>>, %arg9: memref<2x128x64xf32, #tpu.memory_space<vmem>>, %arg10: memref<64x8xf32, #tpu.memory_space<vmem>>, %arg11: memref<1x8xf32, #tpu.memory_space<vmem>>, %arg12: memref<1x128x8xf32, #tpu.memory_space<vmem>>, %arg13: memref<128x128xf32, #tpu.memory_space<vmem>>) attributes {dimension_semantics = [#tpu.dimension_semantics<parallel>], iteration_bounds = array<i64: 2>, scalar_prefetch = 1 : i64, scratch_operands = 1 : i64, tpu.core_type = #tpu.core_type<tc>, window_params = [{transform_indices = @transform_0, window_bounds = array<i64: 1, 128, 16>}, {transform_indices = @transform_1, window_bounds = array<i64: 1, 256, 16>}, {transform_indices = @transform_2, window_bounds = array<i64: 1, 128, 256>}, {pipeline_mode = #tpu.pipeline_mode<synchronous>, transform_indices = @transform_3, window_bounds = array<i64: 128, 128>}, {pipeline_mode = #tpu.pipeline_mode<synchronous>, transform_indices = @transform_4, window_bounds = array<i64: 16, 64>}, {pipeline_mode = #tpu.pipeline_mode<synchronous>, transform_indices = @transform_5, window_bounds = array<i64: 1, 64>}, {pipeline_mode = #tpu.pipeline_mode<synchronous>, transform_indices = @transform_6, window_bounds = array<i64: 16, 64>}, {pipeline_mode = #tpu.pipeline_mode<synchronous>, transform_indices = @transform_7, window_bounds = array<i64: 2, 128, 64>}, {pipeline_mode = #tpu.pipeline_mode<synchronous>, transform_indices = @transform_8, window_bounds = array<i64: 64, 8>}, {pipeline_mode = #tpu.pipeline_mode<synchronous>, transform_indices = @transform_9, window_bounds = array<i64: 1, 8>}, {transform_indices = @transform_10, window_bounds = array<i64: 1, 128, 8>}]} {
    %c0 = arith.constant 0 : index
    %c0_0 = arith.constant 0 : index
    %c0_1 = arith.constant 0 : index
    %0 = vector.load %arg2[%c0, %c0_0, %c0_1] : memref<1x128x16xf32, #tpu.memory_space<vmem>>, vector<1x128x16xf32>
    %1 = vector.shape_cast %0 : vector<1x128x16xf32> to vector<128x16xf32>
    %c0_2 = arith.constant 0 : index
    %c0_3 = arith.constant 0 : index
    %2 = vector.load %arg6[%c0_2, %c0_3] : memref<16x64xf32, #tpu.memory_space<vmem>>, vector<16x64xf32>
    %cst = arith.constant dense<0.000000e+00> : vector<128x64xf32>
    %3 = tpu.matmul %1, %2, %cst {dimension_numbers = #tpu.dot_dimension_numbers<[1], [0], [0], [1], [0, 0, 1, 1], [], []>} : vector<128x16xf32>, vector<16x64xf32>, vector<128x64xf32> -> vector<128x64xf32>
    %c0_4 = arith.constant 0 : index
    %c0_5 = arith.constant 0 : index
    %4 = vector.load %arg7[%c0_4, %c0_5] : memref<1x64xf32, #tpu.memory_space<vmem>>, vector<1x64xf32>
    %5 = vector.broadcast %4 : vector<1x64xf32> to vector<128x64xf32>
    %6 = arith.addf %3, %5 : vector<128x64xf32>
    %cst_6 = arith.constant 0.000000e+00 : f32
    %7 = vector.broadcast %cst_6 : f32 to vector<128x64xf32>
    %8 = arith.maximumf %6, %7 : vector<128x64xf32>
    %c0_7 = arith.constant 0 : index
    %c0_8 = arith.constant 0 : index
    %c0_9 = arith.constant 0 : index
    %9 = vector.load %arg4[%c0_7, %c0_8, %c0_9] : memref<1x128x256xf32, #tpu.memory_space<vmem>>, vector<1x128x256xf32>
    %10 = vector.shape_cast %9 : vector<1x128x256xf32> to vector<128x256xf32>
    %11 = vector.extract_strided_slice %10 {offsets = [0, 0], sizes = [128, 128], strides = [1, 1]} : vector<128x256xf32> to vector<128x128xf32>
    %12 = vector.extract_strided_slice %10 {offsets = [0, 128], sizes = [128, 128], strides = [1, 1]} : vector<128x256xf32> to vector<128x128xf32>
    %c0_10 = arith.constant 0 : index
    %c0_11 = arith.constant 0 : index
    %13 = vector.load %arg5[%c0_10, %c0_11] : memref<128x128xf32, #tpu.memory_space<vmem>>, vector<128x128xf32>
    %14 = arith.mulf %13, %12 : vector<128x128xf32>
    %cst_12 = arith.constant 1.000000e+00 : f32
    %15 = vector.broadcast %cst_12 : f32 to vector<128x128xf32>
    %16 = arith.subf %15, %13 : vector<128x128xf32>
    %17 = arith.mulf %16, %11 : vector<128x128xf32>
    %18 = arith.addf %14, %17 : vector<128x128xf32>
    %c0_13 = arith.constant 0 : index
    %c0_14 = arith.constant 0 : index
    %c0_15 = arith.constant 0 : index
    %19 = vector.load %arg3[%c0_13, %c0_14, %c0_15] : memref<1x256x16xf32, #tpu.memory_space<vmem>>, vector<1x256x16xf32>
    %20 = vector.shape_cast %19 : vector<1x256x16xf32> to vector<256x16xf32>
    %c0_16 = arith.constant 0 : index
    %c0_17 = arith.constant 0 : index
    %21 = vector.load %arg8[%c0_16, %c0_17] : memref<16x64xf32, #tpu.memory_space<vmem>>, vector<16x64xf32>
    %cst_18 = arith.constant dense<0.000000e+00> : vector<256x64xf32>
    %22 = tpu.matmul %20, %21, %cst_18 {dimension_numbers = #tpu.dot_dimension_numbers<[1], [0], [0], [1], [0, 0, 1, 1], [], []>} : vector<256x16xf32>, vector<16x64xf32>, vector<256x64xf32> -> vector<256x64xf32>
    %cst_19 = arith.constant dense<0.000000e+00> : vector<128x64xf32>
    %23 = tpu.matmul %10, %22, %cst_19 {dimension_numbers = #tpu.dot_dimension_numbers<[1], [0], [0], [1], [0, 0, 1, 1], [], []>} : vector<128x256xf32>, vector<256x64xf32>, vector<128x64xf32> -> vector<128x64xf32>
    %cst_20 = arith.constant 0.000000e+00 : f32
    %24 = vector.broadcast %cst_20 : f32 to vector<128x64xf32>
    %25 = arith.maximumf %23, %24 : vector<128x64xf32>
    %c0_21 = arith.constant 0 : index
    %c64 = arith.constant 64 : index
    %26 = vector.load %arg13[%c0_21, %c64] : memref<128x128xf32, #tpu.memory_space<vmem>>, vector<128x64xf32>
    tpu.vector_store %arg13[%c0_21, %c64], %25 {strides = array<i32>} : memref<128x128xf32, #tpu.memory_space<vmem>>, vector<128x64xf32>,
    %c0_i32 = arith.constant 0 : i32
    %27 = arith.index_cast %c0_i32 : i32 to index
    %28 = memref.load %arg1[%27] : memref<2xf32, #tpu.memory_space<smem>>
    %cst_22 = arith.constant dense<0.000000e+00> : vector<128x64xf32>
    %29 = tpu.matmul %18, %8, %cst_22 {dimension_numbers = #tpu.dot_dimension_numbers<[1], [0], [0], [1], [0, 0, 1, 1], [], []>} : vector<128x128xf32>, vector<128x64xf32>, vector<128x64xf32> -> vector<128x64xf32>
    %c0_23 = arith.constant 0 : index
    %c0_24 = arith.constant 0 : index
    %30 = vector.load %arg13[%c0_23, %c0_24] : memref<128x128xf32, #tpu.memory_space<vmem>>, vector<128x64xf32>
    tpu.vector_store %arg13[%c0_23, %c0_24], %29 {strides = array<i32>} : memref<128x128xf32, #tpu.memory_space<vmem>>, vector<128x64xf32>,
    %c0_25 = arith.constant 0 : index
    %c0_26 = arith.constant 0 : index
    %31 = vector.load %arg13[%c0_25, %c0_26] : memref<128x128xf32, #tpu.memory_space<vmem>>, vector<128x128xf32>
    %32 = arith.index_cast %c0_i32 : i32 to index
    %c0_27 = arith.constant 0 : index
    %c0_28 = arith.constant 0 : index
    %33 = vector.load %arg9[%32, %c0_27, %c0_28] : memref<2x128x64xf32, #tpu.memory_space<vmem>>, vector<1x128x64xf32>
    %34 = vector.shape_cast %33 : vector<1x128x64xf32> to vector<128x64xf32>
    %cst_29 = arith.constant dense<0.000000e+00> : vector<128x64xf32>
    %35 = tpu.matmul %31, %34, %cst_29 {dimension_numbers = #tpu.dot_dimension_numbers<[1], [0], [0], [1], [0, 0, 1, 1], [], []>} : vector<128x128xf32>, vector<128x64xf32>, vector<128x64xf32> -> vector<128x64xf32>
    %cst_30 = arith.constant 0.899999976 : f32
    %36 = vector.broadcast %cst_30 : f32 to vector<128x64xf32>
    %37 = arith.mulf %36, %29 : vector<128x64xf32>
    %cst_31 = arith.constant 1.000000e-01 : f32
    %38 = vector.broadcast %cst_31 : f32 to vector<128x64xf32>
    %39 = arith.mulf %38, %25 : vector<128x64xf32>
    %40 = arith.addf %37, %39 : vector<128x64xf32>
    %41 = vector.broadcast %28 : f32 to vector<128x64xf32>
    %42 = arith.mulf %41, %35 : vector<128x64xf32>
    %cst_32 = arith.constant 1.000000e+00 : f32
    %43 = arith.subf %cst_32, %28 : f32
    %44 = vector.broadcast %43 : f32 to vector<128x64xf32>
    %45 = arith.mulf %44, %40 : vector<128x64xf32>
    %46 = arith.addf %42, %45 : vector<128x64xf32>
    %cst_33 = arith.constant 0.000000e+00 : f32
    %47 = vector.broadcast %cst_33 : f32 to vector<128x64xf32>
    %48 = arith.maximumf %46, %47 : vector<128x64xf32>
    %c1_i32 = arith.constant 1 : i32
    %49 = arith.index_cast %c1_i32 : i32 to index
    %50 = memref.load %arg1[%49] : memref<2xf32, #tpu.memory_space<smem>>
    %cst_34 = arith.constant dense<0.000000e+00> : vector<128x64xf32>
    %51 = tpu.matmul %18, %48, %cst_34 {dimension_numbers = #tpu.dot_dimension_numbers<[1], [0], [0], [1], [0, 0, 1, 1], [], []>} : vector<128x128xf32>, vector<128x64xf32>, vector<128x64xf32> -> vector<128x64xf32>
    %c0_35 = arith.constant 0 : index
    %c0_36 = arith.constant 0 : index
    %52 = vector.load %arg13[%c0_35, %c0_36] : memref<128x128xf32, #tpu.memory_space<vmem>>, vector<128x64xf32>
    tpu.vector_store %arg13[%c0_35, %c0_36], %51 {strides = array<i32>} : memref<128x128xf32, #tpu.memory_space<vmem>>, vector<128x64xf32>,
    %c0_37 = arith.constant 0 : index
    %c0_38 = arith.constant 0 : index
    %53 = vector.load %arg13[%c0_37, %c0_38] : memref<128x128xf32, #tpu.memory_space<vmem>>, vector<128x128xf32>
    %54 = arith.index_cast %c1_i32 : i32 to index
    %c0_39 = arith.constant 0 : index
    %c0_40 = arith.constant 0 : index
    %55 = vector.load %arg9[%54, %c0_39, %c0_40] : memref<2x128x64xf32, #tpu.memory_space<vmem>>, vector<1x128x64xf32>
    %56 = vector.shape_cast %55 : vector<1x128x64xf32> to vector<128x64xf32>
    %cst_41 = arith.constant dense<0.000000e+00> : vector<128x64xf32>
    %57 = tpu.matmul %53, %56, %cst_41 {dimension_numbers = #tpu.dot_dimension_numbers<[1], [0], [0], [1], [0, 0, 1, 1], [], []>} : vector<128x128xf32>, vector<128x64xf32>, vector<128x64xf32> -> vector<128x64xf32>
    %cst_42 = arith.constant 0.899999976 : f32
    %58 = vector.broadcast %cst_42 : f32 to vector<128x64xf32>
    %59 = arith.mulf %58, %51 : vector<128x64xf32>
    %cst_43 = arith.constant 1.000000e-01 : f32
    %60 = vector.broadcast %cst_43 : f32 to vector<128x64xf32>
    %61 = arith.mulf %60, %25 : vector<128x64xf32>
    %62 = arith.addf %59, %61 : vector<128x64xf32>
    %63 = vector.broadcast %50 : f32 to vector<128x64xf32>
    %64 = arith.mulf %63, %57 : vector<128x64xf32>
    %cst_44 = arith.constant 1.000000e+00 : f32
    %65 = arith.subf %cst_44, %50 : f32
    %66 = vector.broadcast %65 : f32 to vector<128x64xf32>
    %67 = arith.mulf %66, %62 : vector<128x64xf32>
    %68 = arith.addf %64, %67 : vector<128x64xf32>
    %cst_45 = arith.constant 0.000000e+00 : f32
    %69 = vector.broadcast %cst_45 : f32 to vector<128x64xf32>
    %70 = arith.maximumf %68, %69 : vector<128x64xf32>
    %c2_i32 = arith.constant 2 : i32
    %c0_46 = arith.constant 0 : index
    %c0_47 = arith.constant 0 : index
    %71 = vector.load %arg10[%c0_46, %c0_47] : memref<64x8xf32, #tpu.memory_space<vmem>>, vector<64x8xf32>
    %cst_48 = arith.constant dense<0.000000e+00> : vector<128x8xf32>
    %72 = tpu.matmul %70, %71, %cst_48 {dimension_numbers = #tpu.dot_dimension_numbers<[1], [0], [0], [1], [0, 0, 1, 1], [], []>} : vector<128x64xf32>, vector<64x8xf32>, vector<128x8xf32> -> vector<128x8xf32>
    %c0_49 = arith.constant 0 : index
    %c0_50 = arith.constant 0 : index
    %73 = vector.load %arg11[%c0_49, %c0_50] : memref<1x8xf32, #tpu.memory_space<vmem>>, vector<1x8xf32>
    %74 = vector.broadcast %73 : vector<1x8xf32> to vector<128x8xf32>
    %75 = arith.addf %72, %74 : vector<128x8xf32>
    %cst_51 = arith.constant dense<0xFF800000> : vector<128xf32>
    %76 = vector.multi_reduction <maximumf>, %75, %cst_51 [1] : vector<128x8xf32> to vector<128xf32>
    %77 = vector.shape_cast %76 : vector<128xf32> to vector<128x1xf32>
    %78 = vector.broadcast %77 : vector<128x1xf32> to vector<128x8xf32>
    %79 = arith.subf %75, %78 : vector<128x8xf32>
    %80 = math.exp %79 : vector<128x8xf32>
    %cst_52 = arith.constant dense<0.000000e+00> : vector<128xf32>
    %81 = vector.multi_reduction <add>, %80, %cst_52 [1] : vector<128x8xf32> to vector<128xf32>
    %82 = vector.shape_cast %81 : vector<128xf32> to vector<128x1xf32>
    %83 = math.log %82 : vector<128x1xf32>
    %84 = arith.addf %83, %77 : vector<128x1xf32>
    %85 = vector.broadcast %84 : vector<128x1xf32> to vector<128x8xf32>
    %86 = arith.subf %75, %85 : vector<128x8xf32>
    %c0_53 = arith.constant 0 : index
    %c0_54 = arith.constant 0 : index
    %c0_55 = arith.constant 0 : index
    %87 = vector.load %arg12[%c0_53, %c0_54, %c0_55] : memref<1x128x8xf32, #tpu.memory_space<vmem>>, vector<1x128x8xf32>
    %88 = vector.shape_cast %87 : vector<1x128x8xf32> to vector<128x8xf32>
    %89 = vector.shape_cast %86 : vector<128x8xf32> to vector<1x128x8xf32>
    tpu.vector_store %arg12[%c0_53, %c0_54, %c0_55], %89 {strides = array<i32>} : memref<1x128x8xf32, #tpu.memory_space<vmem>>, vector<1x128x8xf32>,
    return
  }
  func.func @transform_0(%arg0: i32, %arg1: memref<2xf32, #tpu.memory_space<smem>>) -> (i32, i32, i32) {
    %c0_i32 = arith.constant 0 : i32
    %c0_i32_0 = arith.constant 0 : i32
    %c0_i32_1 = arith.constant 0 : i32
    return %arg0, %c0_i32, %c0_i32_0 : i32, i32, i32
  }
  func.func @transform_1(%arg0: i32, %arg1: memref<2xf32, #tpu.memory_space<smem>>) -> (i32, i32, i32) {
    %c0_i32 = arith.constant 0 : i32
    %c0_i32_0 = arith.constant 0 : i32
    %c0_i32_1 = arith.constant 0 : i32
    return %arg0, %c0_i32, %c0_i32_0 : i32, i32, i32
  }
  func.func @transform_2(%arg0: i32, %arg1: memref<2xf32, #tpu.memory_space<smem>>) -> (i32, i32, i32) {
    %c0_i32 = arith.constant 0 : i32
    %c0_i32_0 = arith.constant 0 : i32
    %c0_i32_1 = arith.constant 0 : i32
    return %arg0, %c0_i32, %c0_i32_0 : i32, i32, i32
  }
  func.func @transform_3(%arg0: i32, %arg1: memref<2xf32, #tpu.memory_space<smem>>) -> (i32, i32) {
    %c0_i32 = arith.constant 0 : i32
    %c0_i32_0 = arith.constant 0 : i32
    %c0_i32_1 = arith.constant 0 : i32
    return %c0_i32, %c0_i32_0 : i32, i32
  }
  func.func @transform_4(%arg0: i32, %arg1: memref<2xf32, #tpu.memory_space<smem>>) -> (i32, i32) {
    %c0_i32 = arith.constant 0 : i32
    %c0_i32_0 = arith.constant 0 : i32
    %c0_i32_1 = arith.constant 0 : i32
    return %c0_i32, %c0_i32_0 : i32, i32
  }
  func.func @transform_5(%arg0: i32, %arg1: memref<2xf32, #tpu.memory_space<smem>>) -> (i32, i32) {
    %c0_i32 = arith.constant 0 : i32
    %c0_i32_0 = arith.constant 0 : i32
    %c0_i32_1 = arith.constant 0 : i32
    return %c0_i32, %c0_i32_0 : i32, i32
  }
  func.func @transform_6(%arg0: i32, %arg1: memref<2xf32, #tpu.memory_space<smem>>) -> (i32, i32) {
    %c0_i32 = arith.constant 0 : i32
    %c0_i32_0 = arith.constant 0 : i32
    %c0_i32_1 = arith.constant 0 : i32
    return %c0_i32, %c0_i32_0 : i32, i32
  }
  func.func @transform_7(%arg0: i32, %arg1: memref<2xf32, #tpu.memory_space<smem>>) -> (i32, i32, i32) {
    %c0_i32 = arith.constant 0 : i32
    %c0_i32_0 = arith.constant 0 : i32
    %c0_i32_1 = arith.constant 0 : i32
    %c0_i32_2 = arith.constant 0 : i32
    return %c0_i32, %c0_i32_0, %c0_i32_1 : i32, i32, i32
  }
  func.func @transform_8(%arg0: i32, %arg1: memref<2xf32, #tpu.memory_space<smem>>) -> (i32, i32) {
    %c0_i32 = arith.constant 0 : i32
    %c0_i32_0 = arith.constant 0 : i32
    %c0_i32_1 = arith.constant 0 : i32
    return %c0_i32, %c0_i32_0 : i32, i32
  }
  func.func @transform_9(%arg0: i32, %arg1: memref<2xf32, #tpu.memory_space<smem>>) -> (i32, i32) {
    %c0_i32 = arith.constant 0 : i32
    %c0_i32_0 = arith.constant 0 : i32
    %c0_i32_1 = arith.constant 0 : i32
    return %c0_i32, %c0_i32_0 : i32, i32
  }
  func.func @transform_10(%arg0: i32, %arg1: memref<2xf32, #tpu.memory_space<smem>>) -> (i32, i32, i32) {
    %c0_i32 = arith.constant 0 : i32
    %c0_i32_0 = arith.constant 0 : i32
    %c0_i32_1 = arith.constant 0 : i32
    return %arg0, %c0_i32, %c0_i32_0 : i32, i32, i32
  }
}

</mosaic_0001>

<llo_original>
// kernel: tpu_custom_call.1
$region0: #{tpu_custom_call.1}
  #allocation0 [shape = 'u32[]', space=smem, size = 0x4, offset = 0x4, fixed_abs, tag = 'smem constant byte address 0x4 - core index']
  #allocation1 [shape = 'u32[144,128]{1,0:T(1,128)}', space=vmem, size = 0x12000, scoped, tag = 'internal scratch']
  #allocation2 [shape = 'f32[128,128]{1,0:T(8,128)}', space=vmem, size = 0x10000, scoped, tag = 'scratch operand']
  #allocation3 [shape = 's32[1]{0}', space=sflag, size = 0x4, scoped, tag = 'scoped memory for tpu_custom_call.1']
  #allocation4 [shape = 'u8[512]{0}', space=smem, size = 0x200, scoped, tag = 'prefetched SMEM operand 0']
  %s0 = inlined_call_operand.vmem [shape: f32[2], index: 0, kind: input, shape index: {}]
  %s1 = inlined_call_operand.vmem [shape: f32[2,128,16], index: 1, kind: input, shape index: {}]
  %s2 = inlined_call_operand.vmem [shape: f32[2,256,16], index: 2, kind: input, shape index: {}]
  %s3 = inlined_call_operand.vmem [shape: f32[2,128,256], index: 3, kind: input, shape index: {}]
  %s4 = inlined_call_operand.vmem [shape: f32[128,128], index: 4, kind: input, shape index: {}]
  %s5 = inlined_call_operand.vmem [shape: f32[16,64], index: 5, kind: input, shape index: {}]
  %s6 = inlined_call_operand.vmem [shape: f32[1,64], index: 6, kind: input, shape index: {}]
  %s7 = inlined_call_operand.vmem [shape: f32[16,64], index: 7, kind: input, shape index: {}]
  %s8 = inlined_call_operand.vmem [shape: f32[2,128,64], index: 8, kind: input, shape index: {}]
  %s9 = inlined_call_operand.vmem [shape: f32[64,8], index: 9, kind: input, shape index: {}]
  %s10 = inlined_call_operand.vmem [shape: f32[1,8], index: 10, kind: input, shape index: {}]
  %s11 = inlined_call_operand.vmem [shape: f32[2,128,8], index: 11, kind: output, shape index: {}]
  %s12 = sld [smem:[#allocation0]]
  $region73: #{tpu_custom_call.1} parent=0
    _
  %s14 = ssub.s32 1, %s12
  %s15 = scalar_select 0, %s14, %s12
  %s16 = sshll.u32 %s0, 4
  %s17 = int_to_ptr.vmem [resolvable:$true] %s16
  %19 = dma.vmem_to_smem %s17, 16, [#allocation4], [#allocation3]
  %20 = dma.done [#allocation3], 16
  %21 = sfence
  loop: start=0, step=1, limit=4
  $region2: #{tpu_custom_call.1} parent=0 // loop_pre_header
    _
  $region3: #{tpu_custom_call.1} parent=0 // loop_header
    %s23 = sphi 0, %s27
    %p24 = scmp.ge.s32.totalorder %s23, 4
    %s33 = sphi 0, %s35
    %s36 = sphi 0, %s33
    %s37 = sphi 0, %s36
    %s53 = sphi 0, %s37
    %s59 = sphi 0, %s61
    %s62 = sphi 0, %s59
    %s63 = sphi 0, %s62
    %s79 = sphi 0, %s63
    %s85 = sphi 0, %s87
    %s88 = sphi 0, %s85
    %s89 = sphi 0, %s88
    %s105 = sphi 0, %s89
    %s109 = sphi 0, %s109
    %s111 = sphi 0, %s109
    %s112 = sphi 0, %s111
    %s126 = sphi 0, %s112
    %s130 = sphi 0, %s130
    %s132 = sphi 0, %s130
    %s133 = sphi 0, %s132
    %s147 = sphi 0, %s133
    %s151 = sphi 0, %s151
    %s153 = sphi 0, %s151
    %s154 = sphi 0, %s153
    %s168 = sphi 0, %s154
    %s172 = sphi 0, %s172
    %s174 = sphi 0, %s172
    %s175 = sphi 0, %s174
    %s189 = sphi 0, %s175
    %s193 = sphi 0, %s193
    %s195 = sphi 0, %s193
    %s196 = sphi 0, %s195
    %s210 = sphi 0, %s196
    %s214 = sphi 0, %s214
    %s216 = sphi 0, %s214
    %s217 = sphi 0, %s216
    %s231 = sphi 0, %s217
    %s235 = sphi 0, %s235
    %s237 = sphi 0, %s235
    %s238 = sphi 0, %s237
    %s252 = sphi 0, %s238
    %s258 = sphi 0, %s260
    %s261 = sphi 0, %s258
    %s262 = sphi 0, %s261
    %s278 = sphi 0, %s262
  $region4: #{tpu_custom_call.1} parent=0 // loop_header_branch
    %26 = sbr.rel (%p24) target = $region8
  $region5: #{tpu_custom_call.1} parent=0 // loop_body
    %s28 = ssub.s32 %s23, 1
    %s29 = ssub.s32 %s23, 2
    %s30 = sadd.s32 %s23, 1
    %s31 = ssub.s32 %s23, %s30
    %p32 = scmp.eq.s32.totalorder %s31, 0
    %s34 = sadd.s32 %s33, 1
    %s35 = scalar_select %p32, %s33, %s34
    %p38 = pneg %p32
    %p39 = scmp.eq.s32.totalorder %s23, 1
    %p40 = por %p38, %p39
    %p41 = scmp.ne.s32.totalorder %s33, %s36
    %p42 = scmp.eq.s32.totalorder %s23, 0
    %p43 = por %p41, %p42
    %p44 = scmp.ne.s32.totalorder %s33, %s36
    %p45 = scmp.eq.s32.totalorder %s28, 1
    %p46 = por %p44, %p45
    %p47 = scmp.ne.s32.totalorder %s36, %s37
    %p48 = scmp.eq.s32.totalorder %s28, 0
    %p49 = por %p47, %p48
    %p50 = scmp.ne.s32.totalorder %s36, %s37
    %p51 = scmp.eq.s32.totalorder %s29, 1
    %p52 = por %p50, %p51
    %p54 = scmp.ne.s32.totalorder %s37, %s53
    %p55 = scmp.eq.s32.totalorder %s29, 0
    %p56 = por %p54, %p55
    %s57 = ssub.s32 %s23, %s30
    %p58 = scmp.eq.s32.totalorder %s57, 0
    %s60 = sadd.s32 %s59, 1
    %s61 = scalar_select %p58, %s59, %s60
    %p64 = pneg %p58
    %p65 = scmp.eq.s32.totalorder %s23, 1
    %p66 = por %p64, %p65
    %p67 = scmp.ne.s32.totalorder %s59, %s62
    %p68 = scmp.eq.s32.totalorder %s23, 0
    %p69 = por %p67, %p68
    %p70 = scmp.ne.s32.totalorder %s59, %s62
    %p71 = scmp.eq.s32.totalorder %s28, 1
    %p72 = por %p70, %p71
    %p73 = scmp.ne.s32.totalorder %s62, %s63
    %p74 = scmp.eq.s32.totalorder %s28, 0
    %p75 = por %p73, %p74
    %p76 = scmp.ne.s32.totalorder %s62, %s63
    %p77 = scmp.eq.s32.totalorder %s29, 1
    %p78 = por %p76, %p77
    %p80 = scmp.ne.s32.totalorder %s63, %s79
    %p81 = scmp.eq.s32.totalorder %s29, 0
    %p82 = por %p80, %p81
    %s83 = ssub.s32 %s23, %s30
    %p84 = scmp.eq.s32.totalorder %s83, 0
    %s86 = sadd.s32 %s85, 1
    %s87 = scalar_select %p84, %s85, %s86
    %p90 = pneg %p84
    %p91 = scmp.eq.s32.totalorder %s23, 1
    %p92 = por %p90, %p91
    %p93 = scmp.ne.s32.totalorder %s85, %s88
    %p94 = scmp.eq.s32.totalorder %s23, 0
    %p95 = por %p93, %p94
    %p96 = scmp.ne.s32.totalorder %s85, %s88
    %p97 = scmp.eq.s32.totalorder %s28, 1
    %p98 = por %p96, %p97
    %p99 = scmp.ne.s32.totalorder %s88, %s89
    %p100 = scmp.eq.s32.totalorder %s28, 0
    %p101 = por %p99, %p100
    %p102 = scmp.ne.s32.totalorder %s88, %s89
    %p103 = scmp.eq.s32.totalorder %s29, 1
    %p104 = por %p102, %p103
    %p106 = scmp.ne.s32.totalorder %s89, %s105
    %p107 = scmp.eq.s32.totalorder %s29, 0
    %p108 = por %p106, %p107
    %s110 = sadd.s32 %s109, 1
    %p113 = scmp.eq.s32.totalorder %s23, 1
    %p114 = scmp.ne.s32.totalorder %s109, %s111
    %p115 = scmp.eq.s32.totalorder %s23, 0
    %p116 = por %p114, %p115
    %p117 = scmp.ne.s32.totalorder %s109, %s111
    %p118 = scmp.eq.s32.totalorder %s28, 1
    %p119 = por %p117, %p118
    %p120 = scmp.ne.s32.totalorder %s111, %s112
    %p121 = scmp.eq.s32.totalorder %s28, 0
    %p122 = por %p120, %p121
    %p123 = scmp.ne.s32.totalorder %s111, %s112
    %p124 = scmp.eq.s32.totalorder %s29, 1
    %p125 = por %p123, %p124
    %p127 = scmp.ne.s32.totalorder %s112, %s126
    %p128 = scmp.eq.s32.totalorder %s29, 0
    %p129 = por %p127, %p128
    %s131 = sadd.s32 %s130, 1
    %p134 = scmp.eq.s32.totalorder %s23, 1
    %p135 = scmp.ne.s32.totalorder %s130, %s132
    %p136 = scmp.eq.s32.totalorder %s23, 0
    %p137 = por %p135, %p136
    %p138 = scmp.ne.s32.totalorder %s130, %s132
    %p139 = scmp.eq.s32.totalorder %s28, 1
    %p140 = por %p138, %p139
    %p141 = scmp.ne.s32.totalorder %s132, %s133
    %p142 = scmp.eq.s32.totalorder %s28, 0
    %p143 = por %p141, %p142
    %p144 = scmp.ne.s32.totalorder %s132, %s133
    %p145 = scmp.eq.s32.totalorder %s29, 1
    %p146 = por %p144, %p145
    %p148 = scmp.ne.s32.totalorder %s133, %s147
    %p149 = scmp.eq.s32.totalorder %s29, 0
    %p150 = por %p148, %p149
    %s152 = sadd.s32 %s151, 1
    %p155 = scmp.eq.s32.totalorder %s23, 1
    %p156 = scmp.ne.s32.totalorder %s151, %s153
    %p157 = scmp.eq.s32.totalorder %s23, 0
    %p158 = por %p156, %p157
    %p159 = scmp.ne.s32.totalorder %s151, %s153
    %p160 = scmp.eq.s32.totalorder %s28, 1
    %p161 = por %p159, %p160
    %p162 = scmp.ne.s32.totalorder %s153, %s154
    %p163 = scmp.eq.s32.totalorder %s28, 0
    %p164 = por %p162, %p163
    %p165 = scmp.ne.s32.totalorder %s153, %s154
    %p166 = scmp.eq.s32.totalorder %s29, 1
    %p167 = por %p165, %p166
    %p169 = scmp.ne.s32.totalorder %s154, %s168
    %p170 = scmp.eq.s32.totalorder %s29, 0
    %p171 = por %p169, %p170
    %s173 = sadd.s32 %s172, 1
    %p176 = scmp.eq.s32.totalorder %s23, 1
    %p177 = scmp.ne.s32.totalorder %s172, %s174
    %p178 = scmp.eq.s32.totalorder %s23, 0
    %p179 = por %p177, %p178
    %p180 = scmp.ne.s32.totalorder %s172, %s174
    %p181 = scmp.eq.s32.totalorder %s28, 1
    %p182 = por %p180, %p181
    %p183 = scmp.ne.s32.totalorder %s174, %s175
    %p184 = scmp.eq.s32.totalorder %s28, 0
    %p185 = por %p183, %p184
    %p186 = scmp.ne.s32.totalorder %s174, %s175
    %p187 = scmp.eq.s32.totalorder %s29, 1
    %p188 = por %p186, %p187
    %p190 = scmp.ne.s32.totalorder %s175, %s189
    %p191 = scmp.eq.s32.totalorder %s29, 0
    %p192 = por %p190, %p191
    %s194 = sadd.s32 %s193, 1
    %p197 = scmp.eq.s32.totalorder %s23, 1
    %p198 = scmp.ne.s32.totalorder %s193, %s195
    %p199 = scmp.eq.s32.totalorder %s23, 0
    %p200 = por %p198, %p199
    %p201 = scmp.ne.s32.totalorder %s193, %s195
    %p202 = scmp.eq.s32.totalorder %s28, 1
    %p203 = por %p201, %p202
    %p204 = scmp.ne.s32.totalorder %s195, %s196
    %p205 = scmp.eq.s32.totalorder %s28, 0
    %p206 = por %p204, %p205
    %p207 = scmp.ne.s32.totalorder %s195, %s196
    %p208 = scmp.eq.s32.totalorder %s29, 1
    %p209 = por %p207, %p208
    %p211 = scmp.ne.s32.totalorder %s196, %s210
    %p212 = scmp.eq.s32.totalorder %s29, 0
    %p213 = por %p211, %p212
    %s215 = sadd.s32 %s214, 1
    %p218 = scmp.eq.s32.totalorder %s23, 1
    %p219 = scmp.ne.s32.totalorder %s214, %s216
    %p220 = scmp.eq.s32.totalorder %s23, 0
    %p221 = por %p219, %p220
    %p222 = scmp.ne.s32.totalorder %s214, %s216
    %p223 = scmp.eq.s32.totalorder %s28, 1
    %p224 = por %p222, %p223
    %p225 = scmp.ne.s32.totalorder %s216, %s217
    %p226 = scmp.eq.s32.totalorder %s28, 0
    %p227 = por %p225, %p226
    %p228 = scmp.ne.s32.totalorder %s216, %s217
    %p229 = scmp.eq.s32.totalorder %s29, 1
    %p230 = por %p228, %p229
    %p232 = scmp.ne.s32.totalorder %s217, %s231
    %p233 = scmp.eq.s32.totalorder %s29, 0
    %p234 = por %p232, %p233
    %s236 = sadd.s32 %s235, 1
    %p239 = scmp.eq.s32.totalorder %s23, 1
    %p240 = scmp.ne.s32.totalorder %s235, %s237
    %p241 = scmp.eq.s32.totalorder %s23, 0
    %p242 = por %p240, %p241
    %p243 = scmp.ne.s32.totalorder %s235, %s237
    %p244 = scmp.eq.s32.totalorder %s28, 1
    %p245 = por %p243, %p244
    %p246 = scmp.ne.s32.totalorder %s237, %s238
    %p247 = scmp.eq.s32.totalorder %s28, 0
    %p248 = por %p246, %p247
    %p249 = scmp.ne.s32.totalorder %s237, %s238
    %p250 = scmp.eq.s32.totalorder %s29, 1
    %p251 = por %p249, %p250
    %p253 = scmp.ne.s32.totalorder %s238, %s252
    %p254 = scmp.eq.s32.totalorder %s29, 0
    %p255 = por %p253, %p254
    %s256 = ssub.s32 %s23, %s30
    %p257 = scmp.eq.s32.totalorder %s256, 0
    %s259 = sadd.s32 %s258, 1
    %s260 = scalar_select %p257, %s258, %s259
    %p263 = pneg %p257
    %p264 = scmp.eq.s32.totalorder %s23, 1
    %p265 = por %p263, %p264
    %p266 = scmp.ne.s32.totalorder %s258, %s261
    %p267 = scmp.eq.s32.totalorder %s23, 0
    %p268 = por %p266, %p267
    %p269 = scmp.ne.s32.totalorder %s258, %s261
    %p270 = scmp.eq.s32.totalorder %s28, 1
    %p271 = por %p269, %p270
    %p272 = scmp.ne.s32.totalorder %s261, %s262
    %p273 = scmp.eq.s32.totalorder %s28, 0
    %p274 = por %p272, %p273
    %p275 = scmp.ne.s32.totalorder %s261, %s262
    %p276 = scmp.eq.s32.totalorder %s29, 1
    %p277 = por %p275, %p276
    %p279 = scmp.ne.s32.totalorder %s262, %s278
    %p280 = scmp.eq.s32.totalorder %s29, 0
    %p281 = por %p279, %p280
    %p282 = scmp.le.s32.totalorder 1, %s23
    %p283 = scmp.lt.s32.totalorder %s23, 3
    %p284 = pnand %p282, %p283
    %p285 = pneg %p284
    // Predicated region
    $region9: #{tpu_custom_call.1} parent=5 // pred_check
      _
    $region10: #{tpu_custom_call.1} parent=5 // pred_check_branch
      %287 = sbr.rel (%p284) target = $region12
    $region11: #{tpu_custom_call.1} parent=5 // pred_region
      %s288 = ssub.s32 %s23, 1
      // Predicated region
      $region13: #{tpu_custom_call.1} parent=11 // pred_check
        %p289 = pneg %p122
      $region14: #{tpu_custom_call.1} parent=11 // pred_check_branch
        %291 = sbr.rel (%p289) target = $region16
      $region15: #{tpu_custom_call.1} parent=11 // pred_region
        _
      $region16: #{tpu_custom_call.1} parent=11 // pred_fallthru
        _
      // Predicated region
      $region17: #{tpu_custom_call.1} parent=11 // pred_check
        %p292 = pneg %p143
      $region18: #{tpu_custom_call.1} parent=11 // pred_check_branch
        %294 = sbr.rel (%p292) target = $region20
      $region19: #{tpu_custom_call.1} parent=11 // pred_region
        _
      $region20: #{tpu_custom_call.1} parent=11 // pred_fallthru
        _
      // Predicated region
      $region21: #{tpu_custom_call.1} parent=11 // pred_check
        %p295 = pneg %p164
      $region22: #{tpu_custom_call.1} parent=11 // pred_check_branch
        %297 = sbr.rel (%p295) target = $region24
      $region23: #{tpu_custom_call.1} parent=11 // pred_region
        _
      $region24: #{tpu_custom_call.1} parent=11 // pred_fallthru
        _
      // Predicated region
      $region25: #{tpu_custom_call.1} parent=11 // pred_check
        %p298 = pneg %p185
      $region26: #{tpu_custom_call.1} parent=11 // pred_check_branch
        %300 = sbr.rel (%p298) target = $region28
      $region27: #{tpu_custom_call.1} parent=11 // pred_region
        _
      $region28: #{tpu_custom_call.1} parent=11 // pred_fallthru
        _
      // Predicated region
      $region29: #{tpu_custom_call.1} parent=11 // pred_check
        %p301 = pneg %p206
      $region30: #{tpu_custom_call.1} parent=11 // pred_check_branch
        %303 = sbr.rel (%p301) target = $region32
      $region31: #{tpu_custom_call.1} parent=11 // pred_region
        _
      $region32: #{tpu_custom_call.1} parent=11 // pred_fallthru
        _
      // Predicated region
      $region33: #{tpu_custom_call.1} parent=11 // pred_check
        %p304 = pneg %p227
      $region34: #{tpu_custom_call.1} parent=11 // pred_check_branch
        %306 = sbr.rel (%p304) target = $region36
      $region35: #{tpu_custom_call.1} parent=11 // pred_region
        _
      $region36: #{tpu_custom_call.1} parent=11 // pred_fallthru
        _
      // Predicated region
      $region37: #{tpu_custom_call.1} parent=11 // pred_check
        %p307 = pneg %p248
      $region38: #{tpu_custom_call.1} parent=11 // pred_check_branch
        %309 = sbr.rel (%p307) target = $region40
      $region39: #{tpu_custom_call.1} parent=11 // pred_region
        _
      $region40: #{tpu_custom_call.1} parent=11 // pred_fallthru
        _
    $region12: #{tpu_custom_call.1} parent=5 // pred_fallthru
      _
    %p310 = scmp.lt.s32.totalorder %s23, 2
    // Predicated region
    $region41: #{tpu_custom_call.1} parent=5 // pred_check
      %p311 = pneg %p310
    $region42: #{tpu_custom_call.1} parent=5 // pred_check_branch
      %313 = sbr.rel (%p311) target = $region44
    $region43: #{tpu_custom_call.1} parent=5 // pred_region
      // Predicated region
      $region45: #{tpu_custom_call.1} parent=43 // pred_check
        %p314 = pneg %p43
      $region46: #{tpu_custom_call.1} parent=43 // pred_check_branch
        %316 = sbr.rel (%p314) target = $region48
      $region47: #{tpu_custom_call.1} parent=43 // pred_region
        %p317 = scmp.lt.s32.totalorder %s23, 1
        %s318 = scalar_select %p317, %s23, 1
        %s319 = smul.addr %s318, 16
        %s320 = smul.addr %s319, 8
        %s321 = scalar_lea.vmem %s1, %s320
      $region48: #{tpu_custom_call.1} parent=43 // pred_fallthru
        _
      // Predicated region
      $region49: #{tpu_custom_call.1} parent=43 // pred_check
        %p322 = pneg %p69
      $region50: #{tpu_custom_call.1} parent=43 // pred_check_branch
        %324 = sbr.rel (%p322) target = $region52
      $region51: #{tpu_custom_call.1} parent=43 // pred_region
        %p325 = scmp.lt.s32.totalorder %s23, 1
        %s326 = scalar_select %p325, %s23, 1
        %s327 = smul.addr %s326, 32
        %s328 = smul.addr %s327, 8
        %s329 = scalar_lea.vmem %s2, %s328
      $region52: #{tpu_custom_call.1} parent=43 // pred_fallthru
        _
      // Predicated region
      $region53: #{tpu_custom_call.1} parent=43 // pred_check
        %p330 = pneg %p95
      $region54: #{tpu_custom_call.1} parent=43 // pred_check_branch
        %332 = sbr.rel (%p330) target = $region56
      $region55: #{tpu_custom_call.1} parent=43 // pred_region
        %p333 = scmp.lt.s32.totalorder %s23, 1
        %s334 = scalar_select %p333, %s23, 1
        %s335 = smul.addr %s334, 32
        %s336 = smul.addr %s335, 8
        %s337 = scalar_lea.vmem %s3, %s336
      $region56: #{tpu_custom_call.1} parent=43 // pred_fallthru
        _
    $region44: #{tpu_custom_call.1} parent=5 // pred_fallthru
      _
    %p338 = scmp.le.s32.totalorder 1, %s23
    %p339 = scmp.lt.s32.totalorder %s23, 3
    %p340 = pnand %p338, %p339
    %p341 = pneg %p340
    // Predicated region
    $region57: #{tpu_custom_call.1} parent=5 // pred_check
      _
    $region58: #{tpu_custom_call.1} parent=5 // pred_check_branch
      %343 = sbr.rel (%p340) target = $region60
    $region59: #{tpu_custom_call.1} parent=5 // pred_region
      %s344 = ssub.s32 %s23, 1
      %p345 = scmp.lt.s32.totalorder %s28, 1
      %s346 = scalar_select %p345, %s28, 1
      %s347 = smul.addr %s346, 16
      %s348 = smul.addr %s347, 8
      %s349 = scalar_lea.vmem %s1, %s348
      %p350 = pneg %p49
      %p351 = pneg %p46
      %p352 = scmp.lt.s32.totalorder %s28, 1
      %s353 = scalar_select %p352, %s28, 1
      %s354 = smul.addr %s353, 32
      %s355 = smul.addr %s354, 8
      %s356 = scalar_lea.vmem %s2, %s355
      %p357 = pneg %p75
      %p358 = pneg %p72
      %p359 = scmp.lt.s32.totalorder %s28, 1
      %s360 = scalar_select %p359, %s28, 1
      %s361 = smul.addr %s360, 32
      %s362 = smul.addr %s361, 8
      %s363 = scalar_lea.vmem %s3, %s362
      %p364 = pneg %p101
      %p365 = pneg %p98
      %p366 = pneg %p122
      %p367 = pneg %p119
      %p368 = pneg %p143
      %p369 = pneg %p140
      %p370 = pneg %p164
      %p371 = pneg %p161
      %p372 = pneg %p185
      %p373 = pneg %p182
      %p374 = pneg %p206
      %p375 = pneg %p203
      %p376 = pneg %p227
      %p377 = pneg %p224
      %p378 = pneg %p248
      %p379 = pneg %p245
      %p380 = pneg %p274
      %p381 = pneg %p271
      %p382 = scmp.lt.s32.totalorder %s28, 1
      %s383 = scalar_select %p382, %s28, 1
      %s384 = smul.addr %s383, 16
      %s385 = smul.addr %s384, 8
      %s386 = scalar_lea.vmem %s11, %s385
      %p387 = scmp.lt.s32.totalorder %s28, 1
      %s388 = scalar_select %p387, %s28, 1
      %s389 = smul.addr %s388, 16
      %s390 = smul.addr %s389, 8
      %s391 = scalar_lea.vmem %s1, %s390
      %p392 = scmp.lt.s32.totalorder %s28, 1
      %s393 = scalar_select %p392, %s28, 1
      %s394 = smul.addr %s393, 32
      %s395 = smul.addr %s394, 8
      %s396 = scalar_lea.vmem %s2, %s395
      %p397 = scmp.lt.s32.totalorder %s28, 1
      %s398 = scalar_select %p397, %s28, 1
      %s399 = smul.addr %s398, 32
      %s400 = smul.addr %s399, 8
      %s401 = scalar_lea.vmem %s3, %s400
      %p402 = scmp.lt.s32.totalorder %s28, 1
      %s403 = scalar_select %p402, %s28, 1
      %s404 = smul.addr %s403, 16
      %s405 = smul.addr %s404, 8
      %s406 = scalar_lea.vmem %s11, %s405
      %v407 = vld [vmem:[%s391] sm:$0xff]
      %v408 = vld [vmem:[%s391 + $0x8] sm:$0xff]
      %v409 = vld [vmem:[%s391 + $0x10] sm:$0xff]
      %v410 = vld [vmem:[%s391 + $0x18] sm:$0xff]
      %v411 = vld [vmem:[%s391 + $0x20] sm:$0xff]
      %v412 = vld [vmem:[%s391 + $0x28] sm:$0xff]
      %v413 = vld [vmem:[%s391 + $0x30] sm:$0xff]
      %v414 = vld [vmem:[%s391 + $0x38] sm:$0xff]
      %v415 = vld [vmem:[%s391 + $0x40] sm:$0xff]
      %v416 = vld [vmem:[%s391 + $0x48] sm:$0xff]
      %v417 = vld [vmem:[%s391 + $0x50] sm:$0xff]
      %v418 = vld [vmem:[%s391 + $0x58] sm:$0xff]
      %v419 = vld [vmem:[%s391 + $0x60] sm:$0xff]
      %v420 = vld [vmem:[%s391 + $0x68] sm:$0xff]
      %v421 = vld [vmem:[%s391 + $0x70] sm:$0xff]
      %v422 = vld [vmem:[%s391 + $0x78] sm:$0xff]
      %v423 = vld [vmem:[%s5] sm:$0xff]
      %v424 = vld [vmem:[%s5 + $0x8] sm:$0xff]
      %v425 = vld [vmem:[%s6] sm:$0x1]
      %v427 = vlaneseq
      %v428 = vshrl.u32 %v427, 7
      %v429 = vsub.s32 0, %v428
      %v430 = vrot.slane %v425, %v429
      %vm432 = vcmask 130048
      %v434 = vsel %vm432, %v407, 0
      %v437 = vsel %vm432, %v408, 0
      %v440 = vsel %vm432, %v409, 0
      %v443 = vsel %vm432, %v410, 0
      %v446 = vsel %vm432, %v411, 0
      %v449 = vsel %vm432, %v412, 0
      %v452 = vsel %vm432, %v413, 0
      %v455 = vsel %vm432, %v414, 0
      %v458 = vsel %vm432, %v415, 0
      %v461 = vsel %vm432, %v416, 0
      %v464 = vsel %vm432, %v417, 0
      %v467 = vsel %vm432, %v418, 0
      %v470 = vsel %vm432, %v419, 0
      %v473 = vsel %vm432, %v420, 0
      %v476 = vsel %vm432, %v421, 0
      %v479 = vsel %vm432, %v422, 0
      %481 = vmatprep.subr.mxu0 0.0
      %482 = vmatpush1.msra.mxu0 %v423
      %483 = vmatprep.subr.mxu0 0.0
      %484 = vmatpush1.msra.mxu0 %v424
      %485 = vmatprep.subr.mxu0 0.0
      %486 = vmatpush1.msra.mxu0 0.0
      %487 = vmatprep.subr.mxu0 0.0
      %488 = vmatpush1.msra.mxu0 0.0
      %489 = vmatprep.subr.mxu0 0.0
      %490 = vmatpush1.msra.mxu0 0.0
      %491 = vmatprep.subr.mxu0 0.0
      %492 = vmatpush1.msra.mxu0 0.0
      %493 = vmatprep.subr.mxu0 0.0
      %494 = vmatpush1.msra.mxu0 0.0
      %495 = vmatprep.subr.mxu0 0.0
      %496 = vmatpush1.msra.mxu0 0.0
      %497 = vmatprep.subr.mxu0 0.0
      %498 = vmatpush1.msra.mxu0 0.0
      %499 = vmatprep.subr.mxu0 0.0
      %500 = vmatpush1.msra.mxu0 0.0
      %501 = vmatprep.subr.mxu0 0.0
      %502 = vmatpush1.msra.mxu0 0.0
      %503 = vmatprep.subr.mxu0 0.0
      %504 = vmatpush1.msra.mxu0 0.0
      %505 = vmatprep.subr.mxu0 0.0
      %506 = vmatpush1.msra.mxu0 0.0
      %507 = vmatprep.subr.mxu0 0.0
      %508 = vmatpush1.msra.mxu0 0.0
      %509 = vmatprep.subr.mxu0 0.0
      %510 = vmatpush1.msra.mxu0 0.0
      %511 = vmatprep.subr.mxu0 0.0
      %512 = vmatpush1.msra.mxu0 0.0
      %513 = vmatprep.subr.mxu0 0.0
      %514 = vmatpush1.msra.mxu0 0.0
      %515 = vmatprep.subr.mxu0 0.0
      %516 = vmatpush1.msra.mxu0 0.0
      %517 = vmatprep.subr.mxu0 0.0
      %518 = vmatpush1.msra.mxu0 0.0
      %519 = vmatprep.subr.mxu0 0.0
      %520 = vmatpush1.msra.mxu0 0.0
      %521 = vmatprep.subr.mxu0 0.0
      %522 = vmatpush1.msra.mxu0 0.0
      %523 = vmatprep.subr.mxu0 0.0
      %524 = vmatpush1.msra.mxu0 0.0
      %525 = vmatprep.subr.mxu0 0.0
      %526 = vmatpush1.msra.mxu0 0.0
      %527 = vmatprep.subr.mxu0 0.0
      %528 = vmatpush1.msra.mxu0 0.0
      %529 = vmatprep.subr.mxu0 0.0
      %530 = vmatpush1.msra.mxu0 0.0
      %531 = vmatprep.subr.mxu0 0.0
      %532 = vmatpush1.msra.mxu0 0.0
      %533 = vmatprep.subr.mxu0 0.0
      %534 = vmatpush1.msra.mxu0 0.0
      %535 = vmatprep.subr.mxu0 0.0
      %536 = vmatpush1.msra.mxu0 0.0
      %537 = vmatprep.subr.mxu0 0.0
      %538 = vmatpush1.msra.mxu0 0.0
      %539 = vmatprep.subr.mxu0 0.0
      %540 = vmatpush1.msra.mxu0 0.0
      %541 = vmatprep.subr.mxu0 0.0
      %542 = vmatpush1.msra.mxu0 0.0
      %543 = vmatprep.subr.mxu0 0.0
      %544 = vmatpush1.msra.mxu0 0.0
      %545 = vmatprep.mubr.f32.mxu0 0.0
      %546 = vmatmul.mubr.f32.gmra.mrb[0].mxu0 %v434
      %v547 = vpop.f32.mrb[0].mxu0
      %v548 = vadd.f32 %v430, %v547
      %v549 = vpop.f32.mrb[0].mxu0
      %550 = vmatprep.mubr.f32.mxu0 0.0
      %551 = vmatmul.mubr.f32.gmra.mrb[0].mxu0 %v437
      %v552 = vpop.f32.mrb[0].mxu0
      %v553 = vadd.f32 %v430, %v552
      %v554 = vpop.f32.mrb[0].mxu0
      %555 = vmatprep.mubr.f32.mxu0 0.0
      %556 = vmatmul.mubr.f32.gmra.mrb[0].mxu0 %v440
      %v557 = vpop.f32.mrb[0].mxu0
      %v558 = vadd.f32 %v430, %v557
      %v559 = vpop.f32.mrb[0].mxu0
      %560 = vmatprep.mubr.f32.mxu0 0.0
      %561 = vmatmul.mubr.f32.gmra.mrb[0].mxu0 %v443
      %v562 = vpop.f32.mrb[0].mxu0
      %v563 = vadd.f32 %v430, %v562
      %v564 = vpop.f32.mrb[0].mxu0
      %565 = vmatprep.mubr.f32.mxu0 0.0
      %566 = vmatmul.mubr.f32.gmra.mrb[0].mxu0 %v446
      %v567 = vpop.f32.mrb[0].mxu0
      %v568 = vadd.f32 %v430, %v567
      %v569 = vpop.f32.mrb[0].mxu0
      %570 = vmatprep.mubr.f32.mxu0 0.0
      %571 = vmatmul.mubr.f32.gmra.mrb[0].mxu0 %v449
      %v572 = vpop.f32.mrb[0].mxu0
      %v573 = vadd.f32 %v430, %v572
      %v574 = vpop.f32.mrb[0].mxu0
      %575 = vmatprep.mubr.f32.mxu0 0.0
      %576 = vmatmul.mubr.f32.gmra.mrb[0].mxu0 %v452
      %v577 = vpop.f32.mrb[0].mxu0
      %v578 = vadd.f32 %v430, %v577
      %v579 = vpop.f32.mrb[0].mxu0
      %580 = vmatprep.mubr.f32.mxu0 0.0
      %581 = vmatmul.mubr.f32.gmra.mrb[0].mxu0 %v455
      %v582 = vpop.f32.mrb[0].mxu0
      %v583 = vadd.f32 %v430, %v582
      %v584 = vpop.f32.mrb[0].mxu0
      %585 = vmatprep.mubr.f32.mxu0 0.0
      %586 = vmatmul.mubr.f32.gmra.mrb[0].mxu0 %v458
      %v587 = vpop.f32.mrb[0].mxu0
      %v588 = vadd.f32 %v430, %v587
      %v589 = vpop.f32.mrb[0].mxu0
      %590 = vmatprep.mubr.f32.mxu0 0.0
      %591 = vmatmul.mubr.f32.gmra.mrb[0].mxu0 %v461
      %v592 = vpop.f32.mrb[0].mxu0
      %v593 = vadd.f32 %v430, %v592
      %v594 = vpop.f32.mrb[0].mxu0
      %595 = vmatprep.mubr.f32.mxu0 0.0
      %596 = vmatmul.mubr.f32.gmra.mrb[0].mxu0 %v464
      %v597 = vpop.f32.mrb[0].mxu0
      %v598 = vadd.f32 %v430, %v597
      %v599 = vpop.f32.mrb[0].mxu0
      %600 = vmatprep.mubr.f32.mxu0 0.0
      %601 = vmatmul.mubr.f32.gmra.mrb[0].mxu0 %v467
      %v602 = vpop.f32.mrb[0].mxu0
      %v603 = vadd.f32 %v430, %v602
      %v604 = vpop.f32.mrb[0].mxu0
      %605 = vmatprep.mubr.f32.mxu0 0.0
      %606 = vmatmul.mubr.f32.gmra.mrb[0].mxu0 %v470
      %v607 = vpop.f32.mrb[0].mxu0
      %v608 = vadd.f32 %v430, %v607
      %v609 = vpop.f32.mrb[0].mxu0
      %610 = vmatprep.mubr.f32.mxu0 0.0
      %611 = vmatmul.mubr.f32.gmra.mrb[0].mxu0 %v473
      %v612 = vpop.f32.mrb[0].mxu0
      %v613 = vadd.f32 %v430, %v612
      %v614 = vpop.f32.mrb[0].mxu0
      %615 = vmatprep.mubr.f32.mxu0 0.0
      %616 = vmatmul.mubr.f32.gmra.mrb[0].mxu0 %v476
      %v617 = vpop.f32.mrb[0].mxu0
      %v618 = vadd.f32 %v430, %v617
      %v619 = vpop.f32.mrb[0].mxu0
      %620 = vmatprep.mubr.f32.mxu0 0.0
      %621 = vmatmul.mubr.f32.gmra.mrb[0].mxu0 %v479
      %v622 = vpop.f32.mrb[0].mxu0
      %v623 = vadd.f32 %v430, %v622
      %v624 = vpop.f32.mrb[0].mxu0
      %625 = vdwg.mxu0
      %v626 = vmax.f32 %v548, 0.0
      %v627 = vmax.f32 %v553, 0.0
      %v628 = vmax.f32 %v558, 0.0
      %v629 = vmax.f32 %v563, 0.0
      %v630 = vmax.f32 %v568, 0.0
      %v631 = vmax.f32 %v573, 0.0
      %v632 = vmax.f32 %v578, 0.0
      %v633 = vmax.f32 %v583, 0.0
      %v634 = vmax.f32 %v588, 0.0
      %v635 = vmax.f32 %v593, 0.0
      %v636 = vmax.f32 %v598, 0.0
      %v637 = vmax.f32 %v603, 0.0
      %v638 = vmax.f32 %v608, 0.0
      %v639 = vmax.f32 %v613, 0.0
      %v640 = vmax.f32 %v618, 0.0
      %v641 = vmax.f32 %v623, 0.0
      %v642 = vld [vmem:[%s401] sm:$0xff]
      %v643 = vld [vmem:[%s401 + $0x8] sm:$0xff]
      %v644 = vld [vmem:[%s401 + $0x10] sm:$0xff]
      %v645 = vld [vmem:[%s401 + $0x18] sm:$0xff]
      %v646 = vld [vmem:[%s401 + $0x20] sm:$0xff]
      %v647 = vld [vmem:[%s401 + $0x28] sm:$0xff]
      %v648 = vld [vmem:[%s401 + $0x30] sm:$0xff]
      %v649 = vld [vmem:[%s401 + $0x38] sm:$0xff]
      %v650 = vld [vmem:[%s401 + $0x40] sm:$0xff]
      %v651 = vld [vmem:[%s401 + $0x48] sm:$0xff]
      %v652 = vld [vmem:[%s401 + $0x50] sm:$0xff]
      %v653 = vld [vmem:[%s401 + $0x58] sm:$0xff]
      %v654 = vld [vmem:[%s401 + $0x60] sm:$0xff]
      %v655 = vld [vmem:[%s401 + $0x68] sm:$0xff]
      %v656 = vld [vmem:[%s401 + $0x70] sm:$0xff]
      %v657 = vld [vmem:[%s401 + $0x78] sm:$0xff]
      %v658 = vld [vmem:[%s401 + $0x80] sm:$0xff]
      %v659 = vld [vmem:[%s401 + $0x88] sm:$0xff]
      %v660 = vld [vmem:[%s401 + $0x90] sm:$0xff]
      %v661 = vld [vmem:[%s401 + $0x98] sm:$0xff]
      %v662 = vld [vmem:[%s401 + $0xa0] sm:$0xff]
      %v663 = vld [vmem:[%s401 + $0xa8] sm:$0xff]
      %v664 = vld [vmem:[%s401 + $0xb0] sm:$0xff]
      %v665 = vld [vmem:[%s401 + $0xb8] sm:$0xff]
      %v666 = vld [vmem:[%s401 + $0xc0] sm:$0xff]
      %v667 = vld [vmem:[%s401 + $0xc8] sm:$0xff]
      %v668 = vld [vmem:[%s401 + $0xd0] sm:$0xff]
      %v669 = vld [vmem:[%s401 + $0xd8] sm:$0xff]
      %v670 = vld [vmem:[%s401 + $0xe0] sm:$0xff]
      %v671 = vld [vmem:[%s401 + $0xe8] sm:$0xff]
      %v672 = vld [vmem:[%s401 + $0xf0] sm:$0xff]
      %v673 = vld [vmem:[%s401 + $0xf8] sm:$0xff]
      %v674 = vld [vmem:[%s4] sm:$0xff]
      %v675 = vld [vmem:[%s4 + $0x8] sm:$0xff]
      %v676 = vld [vmem:[%s4 + $0x10] sm:$0xff]
      %v677 = vld [vmem:[%s4 + $0x18] sm:$0xff]
      %v678 = vld [vmem:[%s4 + $0x20] sm:$0xff]
      %v679 = vld [vmem:[%s4 + $0x28] sm:$0xff]
      %v680 = vld [vmem:[%s4 + $0x30] sm:$0xff]
      %v681 = vld [vmem:[%s4 + $0x38] sm:$0xff]
      %v682 = vld [vmem:[%s4 + $0x40] sm:$0xff]
      %v683 = vld [vmem:[%s4 + $0x48] sm:$0xff]
      %v684 = vld [vmem:[%s4 + $0x50] sm:$0xff]
      %v685 = vld [vmem:[%s4 + $0x58] sm:$0xff]
      %v686 = vld [vmem:[%s4 + $0x60] sm:$0xff]
      %v687 = vld [vmem:[%s4 + $0x68] sm:$0xff]
      %v688 = vld [vmem:[%s4 + $0x70] sm:$0xff]
      %v689 = vld [vmem:[%s4 + $0x78] sm:$0xff]
      %v690 = vmul.f32 %v674, %v643
      %v691 = vmul.f32 %v675, %v645
      %v692 = vmul.f32 %v676, %v647
      %v693 = vmul.f32 %v677, %v649
      %v694 = vmul.f32 %v678, %v651
      %v695 = vmul.f32 %v679, %v653
      %v696 = vmul.f32 %v680, %v655
      %v697 = vmul.f32 %v681, %v657
      %v698 = vmul.f32 %v682, %v659
      %v699 = vmul.f32 %v683, %v661
      %v700 = vmul.f32 %v684, %v663
      %v701 = vmul.f32 %v685, %v665
      %v702 = vmul.f32 %v686, %v667
      %v703 = vmul.f32 %v687, %v669
      %v704 = vmul.f32 %v688, %v671
      %v705 = vmul.f32 %v689, %v673
      %v706 = vsub.f32 1.0, %v674
      %v707 = vsub.f32 1.0, %v675
      %v708 = vsub.f32 1.0, %v676
      %v709 = vsub.f32 1.0, %v677
      %v710 = vsub.f32 1.0, %v678
      %v711 = vsub.f32 1.0, %v679
      %v712 = vsub.f32 1.0, %v680
      %v713 = vsub.f32 1.0, %v681
      %v714 = vsub.f32 1.0, %v682
      %v715 = vsub.f32 1.0, %v683
      %v716 = vsub.f32 1.0, %v684
      %v717 = vsub.f32 1.0, %v685
      %v718 = vsub.f32 1.0, %v686
      %v719 = vsub.f32 1.0, %v687
      %v720 = vsub.f32 1.0, %v688
      %v721 = vsub.f32 1.0, %v689
      %v722 = vmul.f32 %v706, %v642
      %v723 = vmul.f32 %v707, %v644
      %v724 = vmul.f32 %v708, %v646
      %v725 = vmul.f32 %v709, %v648
      %v726 = vmul.f32 %v710, %v650
      %v727 = vmul.f32 %v711, %v652
      %v728 = vmul.f32 %v712, %v654
      %v729 = vmul.f32 %v713, %v656
      %v730 = vmul.f32 %v714, %v658
      %v731 = vmul.f32 %v715, %v660
      %v732 = vmul.f32 %v716, %v662
      %v733 = vmul.f32 %v717, %v664
      %v734 = vmul.f32 %v718, %v666
      %v735 = vmul.f32 %v719, %v668
      %v736 = vmul.f32 %v720, %v670
      %v737 = vmul.f32 %v721, %v672
      %v738 = vadd.f32 %v690, %v722
      %v739 = vadd.f32 %v691, %v723
      %v740 = vadd.f32 %v692, %v724
      %v741 = vadd.f32 %v693, %v725
      %v742 = vadd.f32 %v694, %v726
      %v743 = vadd.f32 %v695, %v727
      %v744 = vadd.f32 %v696, %v728
      %v745 = vadd.f32 %v697, %v729
      %v746 = vadd.f32 %v698, %v730
      %v747 = vadd.f32 %v699, %v731
      %v748 = vadd.f32 %v700, %v732
      %v749 = vadd.f32 %v701, %v733
      %v750 = vadd.f32 %v702, %v734
      %v751 = vadd.f32 %v703, %v735
      %v752 = vadd.f32 %v704, %v736
      %v753 = vadd.f32 %v705, %v737
      %v754 = vld [vmem:[%s396] sm:$0xff]
      %v755 = vld [vmem:[%s396 + $0x8] sm:$0xff]
      %v756 = vld [vmem:[%s396 + $0x10] sm:$0xff]
      %v757 = vld [vmem:[%s396 + $0x18] sm:$0xff]
      %v758 = vld [vmem:[%s396 + $0x20] sm:$0xff]
      %v759 = vld [vmem:[%s396 + $0x28] sm:$0xff]
      %v760 = vld [vmem:[%s396 + $0x30] sm:$0xff]
      %v761 = vld [vmem:[%s396 + $0x38] sm:$0xff]
      %v762 = vld [vmem:[%s396 + $0x40] sm:$0xff]
      %v763 = vld [vmem:[%s396 + $0x48] sm:$0xff]
      %v764 = vld [vmem:[%s396 + $0x50] sm:$0xff]
      %v765 = vld [vmem:[%s396 + $0x58] sm:$0xff]
      %v766 = vld [vmem:[%s396 + $0x60] sm:$0xff]
      %v767 = vld [vmem:[%s396 + $0x68] sm:$0xff]
      %v768 = vld [vmem:[%s396 + $0x70] sm:$0xff]
      %v769 = vld [vmem:[%s396 + $0x78] sm:$0xff]
      %v770 = vld [vmem:[%s396 + $0x80] sm:$0xff]
      %v771 = vld [vmem:[%s396 + $0x88] sm:$0xff]
      %v772 = vld [vmem:[%s396 + $0x90] sm:$0xff]
      %v773 = vld [vmem:[%s396 + $0x98] sm:$0xff]
      %v774 = vld [vmem:[%s396 + $0xa0] sm:$0xff]
      %v775 = vld [vmem:[%s396 + $0xa8] sm:$0xff]
      %v776 = vld [vmem:[%s396 + $0xb0] sm:$0xff]
      %v777 = vld [vmem:[%s396 + $0xb8] sm:$0xff]
      %v778 = vld [vmem:[%s396 + $0xc0] sm:$0xff]
      %v779 = vld [vmem:[%s396 + $0xc8] sm:$0xff]
      %v780 = vld [vmem:[%s396 + $0xd0] sm:$0xff]
      %v781 = vld [vmem:[%s396 + $0xd8] sm:$0xff]
      %v782 = vld [vmem:[%s396 + $0xe0] sm:$0xff]
      %v783 = vld [vmem:[%s396 + $0xe8] sm:$0xff]
      %v784 = vld [vmem:[%s396 + $0xf0] sm:$0xff]
      %v785 = vld [vmem:[%s396 + $0xf8] sm:$0xff]
      %v786 = vld [vmem:[%s7] sm:$0xff]
      %v787 = vld [vmem:[%s7 + $0x8] sm:$0xff]
      %v789 = vsel %vm432, %v754, 0
      %v792 = vsel %vm432, %v755, 0
      %v795 = vsel %vm432, %v756, 0
      %v798 = vsel %vm432, %v757, 0
      %v801 = vsel %vm432, %v758, 0
      %v804 = vsel %vm432, %v759, 0
      %v807 = vsel %vm432, %v760, 0
      %v810 = vsel %vm432, %v761, 0
      %v813 = vsel %vm432, %v762, 0
      %v816 = vsel %vm432, %v763, 0
      %v819 = vsel %vm432, %v764, 0
      %v822 = vsel %vm432, %v765, 0
      %v825 = vsel %vm432, %v766, 0
      %v828 = vsel %vm432, %v767, 0
      %v831 = vsel %vm432, %v768, 0
      %v834 = vsel %vm432, %v769, 0
      %v837 = vsel %vm432, %v770, 0
      %v840 = vsel %vm432, %v771, 0
      %v843 = vsel %vm432, %v772, 0
      %v846 = vsel %vm432, %v773, 0
      %v849 = vsel %vm432, %v774, 0
      %v852 = vsel %vm432, %v775, 0
      %v855 = vsel %vm432, %v776, 0
      %v858 = vsel %vm432, %v777, 0
      %v861 = vsel %vm432, %v778, 0
      %v864 = vsel %vm432, %v779, 0
      %v867 = vsel %vm432, %v780, 0
      %v870 = vsel %vm432, %v781, 0
      %v873 = vsel %vm432, %v782, 0
      %v876 = vsel %vm432, %v783, 0
      %v879 = vsel %vm432, %v784, 0
      %v882 = vsel %vm432, %v785, 0
      %884 = vmatprep.subr.mxu0 0.0
      %885 = vmatpush1.msra.mxu0 %v786
      %886 = vmatprep.subr.mxu0 0.0
      %887 = vmatpush1.msra.mxu0 %v787
      %888 = vmatprep.subr.mxu0 0.0
      %889 = vmatpush1.msra.mxu0 0.0
      %890 = vmatprep.subr.mxu0 0.0
      %891 = vmatpush1.msra.mxu0 0.0
      %892 = vmatprep.subr.mxu0 0.0
      %893 = vmatpush1.msra.mxu0 0.0
      %894 = vmatprep.subr.mxu0 0.0
      %895 = vmatpush1.msra.mxu0 0.0
      %896 = vmatprep.subr.mxu0 0.0
      %897 = vmatpush1.msra.mxu0 0.0
      %898 = vmatprep.subr.mxu0 0.0
      %899 = vmatpush1.msra.mxu0 0.0
      %900 = vmatprep.subr.mxu0 0.0
      %901 = vmatpush1.msra.mxu0 0.0
      %902 = vmatprep.subr.mxu0 0.0
      %903 = vmatpush1.msra.mxu0 0.0
      %904 = vmatprep.subr.mxu0 0.0
      %905 = vmatpush1.msra.mxu0 0.0
      %906 = vmatprep.subr.mxu0 0.0
      %907 = vmatpush1.msra.mxu0 0.0
      %908 = vmatprep.subr.mxu0 0.0
      %909 = vmatpush1.msra.mxu0 0.0
      %910 = vmatprep.subr.mxu0 0.0
      %911 = vmatpush1.msra.mxu0 0.0
      %912 = vmatprep.subr.mxu0 0.0
      %913 = vmatpush1.msra.mxu0 0.0
      %914 = vmatprep.subr.mxu0 0.0
      %915 = vmatpush1.msra.mxu0 0.0
      %916 = vmatprep.subr.mxu0 0.0
      %917 = vmatpush1.msra.mxu0 0.0
      %918 = vmatprep.subr.mxu0 0.0
      %919 = vmatpush1.msra.mxu0 0.0
      %920 = vmatprep.subr.mxu0 0.0
      %921 = vmatpush1.msra.mxu0 0.0
      %922 = vmatprep.subr.mxu0 0.0
      %923 = vmatpush1.msra.mxu0 0.0
      %924 = vmatprep.subr.mxu0 0.0
      %925 = vmatpush1.msra.mxu0 0.0
      %926 = vmatprep.subr.mxu0 0.0
      %927 = vmatpush1.msra.mxu0 0.0
      %928 = vmatprep.subr.mxu0 0.0
      %929 = vmatpush1.msra.mxu0 0.0
      %930 = vmatprep.subr.mxu0 0.0
      %931 = vmatpush1.msra.mxu0 0.0
      %932 = vmatprep.subr.mxu0 0.0
      %933 = vmatpush1.msra.mxu0 0.0
      %934 = vmatprep.subr.mxu0 0.0
      %935 = vmatpush1.msra.mxu0 0.0
      %936 = vmatprep.subr.mxu0 0.0
      %937 = vmatpush1.msra.mxu0 0.0
      %938 = vmatprep.subr.mxu0 0.0
      %939 = vmatpush1.msra.mxu0 0.0
      %940 = vmatprep.subr.mxu0 0.0
      %941 = vmatpush1.msra.mxu0 0.0
      %942 = vmatprep.subr.mxu0 0.0
      %943 = vmatpush1.msra.mxu0 0.0
      %944 = vmatprep.subr.mxu0 0.0
      %945 = vmatpush1.msra.mxu0 0.0
      %946 = vmatprep.subr.mxu0 0.0
      %947 = vmatpush1.msra.mxu0 0.0
      %948 = vmatprep.mubr.f32.mxu0 0.0
      %949 = vmatmul.mubr.f32.gmra.mrb[0].mxu0 %v789
      %v950 = vpop.f32.mrb[0].mxu0
      %v951 = vadd.f32 0.0, %v950
      %v952 = vpop.f32.mrb[0].mxu0
      %953 = vmatprep.mubr.f32.mxu0 0.0
      %954 = vmatmul.mubr.f32.gmra.mrb[0].mxu0 %v792
      %v955 = vpop.f32.mrb[0].mxu0
      %v956 = vadd.f32 0.0, %v955
      %v957 = vpop.f32.mrb[0].mxu0
      %958 = vmatprep.mubr.f32.mxu0 0.0
      %959 = vmatmul.mubr.f32.gmra.mrb[0].mxu0 %v795
      %v960 = vpop.f32.mrb[0].mxu0
      %v961 = vadd.f32 0.0, %v960
      %v962 = vpop.f32.mrb[0].mxu0
      %963 = vmatprep.mubr.f32.mxu0 0.0
      %964 = vmatmul.mubr.f32.gmra.mrb[0].mxu0 %v798
      %v965 = vpop.f32.mrb[0].mxu0
      %v966 = vadd.f32 0.0, %v965
      %v967 = vpop.f32.mrb[0].mxu0
      %968 = vmatprep.mubr.f32.mxu0 0.0
      %969 = vmatmul.mubr.f32.gmra.mrb[0].mxu0 %v801
      %v970 = vpop.f32.mrb[0].mxu0
      %v971 = vadd.f32 0.0, %v970
      %v972 = vpop.f32.mrb[0].mxu0
      %973 = vmatprep.mubr.f32.mxu0 0.0
      %974 = vmatmul.mubr.f32.gmra.mrb[0].mxu0 %v804
      %v975 = vpop.f32.mrb[0].mxu0
      %v976 = vadd.f32 0.0, %v975
      %v977 = vpop.f32.mrb[0].mxu0
      %978 = vmatprep.mubr.f32.mxu0 0.0
      %979 = vmatmul.mubr.f32.gmra.mrb[0].mxu0 %v807
      %v980 = vpop.f32.mrb[0].mxu0
      %v981 = vadd.f32 0.0, %v980
      %v982 = vpop.f32.mrb[0].mxu0
      %983 = vmatprep.mubr.f32.mxu0 0.0
      %984 = vmatmul.mubr.f32.gmra.mrb[0].mxu0 %v810
      %v985 = vpop.f32.mrb[0].mxu0
      %v986 = vadd.f32 0.0, %v985
      %v987 = vpop.f32.mrb[0].mxu0
      %988 = vmatprep.mubr.f32.mxu0 0.0
      %989 = vmatmul.mubr.f32.gmra.mrb[0].mxu0 %v813
      %v990 = vpop.f32.mrb[0].mxu0
      %v991 = vadd.f32 0.0, %v990
      %v992 = vpop.f32.mrb[0].mxu0
      %993 = vmatprep.mubr.f32.mxu0 0.0
      %994 = vmatmul.mubr.f32.gmra.mrb[0].mxu0 %v816
      %v995 = vpop.f32.mrb[0].mxu0
      %v996 = vadd.f32 0.0, %v995
      %v997 = vpop.f32.mrb[0].mxu0
      %998 = vmatprep.mubr.f32.mxu0 0.0
      %999 = vmatmul.mubr.f32.gmra.mrb[0].mxu0 %v819
      %v1000 = vpop.f32.mrb[0].mxu0
      %v1001 = vadd.f32 0.0, %v1000
      %v1002 = vpop.f32.mrb[0].mxu0
      %1003 = vmatprep.mubr.f32.mxu0 0.0
      %1004 = vmatmul.mubr.f32.gmra.mrb[0].mxu0 %v822
      %v1005 = vpop.f32.mrb[0].mxu0
      %v1006 = vadd.f32 0.0, %v1005
      %v1007 = vpop.f32.mrb[0].mxu0
      %1008 = vmatprep.mubr.f32.mxu0 0.0
      %1009 = vmatmul.mubr.f32.gmra.mrb[0].mxu0 %v825
      %v1010 = vpop.f32.mrb[0].mxu0
      %v1011 = vadd.f32 0.0, %v1010
      %v1012 = vpop.f32.mrb[0].mxu0
      %1013 = vmatprep.mubr.f32.mxu0 0.0
      %1014 = vmatmul.mubr.f32.gmra.mrb[0].mxu0 %v828
      %v1015 = vpop.f32.mrb[0].mxu0
      %v1016 = vadd.f32 0.0, %v1015
      %v1017 = vpop.f32.mrb[0].mxu0
      %1018 = vmatprep.mubr.f32.mxu0 0.0
      %1019 = vmatmul.mubr.f32.gmra.mrb[0].mxu0 %v831
      %v1020 = vpop.f32.mrb[0].mxu0
      %v1021 = vadd.f32 0.0, %v1020
      %v1022 = vpop.f32.mrb[0].mxu0
      %1023 = vmatprep.mubr.f32.mxu0 0.0
      %1024 = vmatmul.mubr.f32.gmra.mrb[0].mxu0 %v834
      %v1025 = vpop.f32.mrb[0].mxu0
      %v1026 = vadd.f32 0.0, %v1025
      %v1027 = vpop.f32.mrb[0].mxu0
      %1028 = vmatprep.mubr.f32.mxu0 0.0
      %1029 = vmatmul.mubr.f32.gmra.mrb[0].mxu0 %v837
      %v1030 = vpop.f32.mrb[0].mxu0
      %v1031 = vadd.f32 0.0, %v1030
      %v1032 = vpop.f32.mrb[0].mxu0
      %1033 = vmatprep.mubr.f32.mxu0 0.0
      %1034 = vmatmul.mubr.f32.gmra.mrb[0].mxu0 %v840
      %v1035 = vpop.f32.mrb[0].mxu0
      %v1036 = vadd.f32 0.0, %v1035
      %v1037 = vpop.f32.mrb[0].mxu0
      %1038 = vmatprep.mubr.f32.mxu0 0.0
      %1039 = vmatmul.mubr.f32.gmra.mrb[0].mxu0 %v843
      %v1040 = vpop.f32.mrb[0].mxu0
      %v1041 = vadd.f32 0.0, %v1040
      %v1042 = vpop.f32.mrb[0].mxu0
      %1043 = vmatprep.mubr.f32.mxu0 0.0
      %1044 = vmatmul.mubr.f32.gmra.mrb[0].mxu0 %v846
      %v1045 = vpop.f32.mrb[0].mxu0
      %v1046 = vadd.f32 0.0, %v1045
      %v1047 = vpop.f32.mrb[0].mxu0
      %1048 = vmatprep.mubr.f32.mxu0 0.0
      %1049 = vmatmul.mubr.f32.gmra.mrb[0].mxu0 %v849
      %v1050 = vpop.f32.mrb[0].mxu0
      %v1051 = vadd.f32 0.0, %v1050
      %v1052 = vpop.f32.mrb[0].mxu0
      %1053 = vmatprep.mubr.f32.mxu0 0.0
      %1054 = vmatmul.mubr.f32.gmra.mrb[0].mxu0 %v852
      %v1055 = vpop.f32.mrb[0].mxu0
      %v1056 = vadd.f32 0.0, %v1055
      %v1057 = vpop.f32.mrb[0].mxu0
      %1058 = vmatprep.mubr.f32.mxu0 0.0
      %1059 = vmatmul.mubr.f32.gmra.mrb[0].mxu0 %v855
      %v1060 = vpop.f32.mrb[0].mxu0
      %v1061 = vadd.f32 0.0, %v1060
      %v1062 = vpop.f32.mrb[0].mxu0
      %1063 = vmatprep.mubr.f32.mxu0 0.0
      %1064 = vmatmul.mubr.f32.gmra.mrb[0].mxu0 %v858
      %v1065 = vpop.f32.mrb[0].mxu0
      %v1066 = vadd.f32 0.0, %v1065
      %v1067 = vpop.f32.mrb[0].mxu0
      %1068 = vmatprep.mubr.f32.mxu0 0.0
      %1069 = vmatmul.mubr.f32.gmra.mrb[0].mxu0 %v861
      %v1070 = vpop.f32.mrb[0].mxu0
      %v1071 = vadd.f32 0.0, %v1070
      %v1072 = vpop.f32.mrb[0].mxu0
      %1073 = vmatprep.mubr.f32.mxu0 0.0
      %1074 = vmatmul.mubr.f32.gmra.mrb[0].mxu0 %v864
      %v1075 = vpop.f32.mrb[0].mxu0
      %v1076 = vadd.f32 0.0, %v1075
      %v1077 = vpop.f32.mrb[0].mxu0
      %1078 = vmatprep.mubr.f32.mxu0 0.0
      %1079 = vmatmul.mubr.f32.gmra.mrb[0].mxu0 %v867
      %v1080 = vpop.f32.mrb[0].mxu0
      %v1081 = vadd.f32 0.0, %v1080
      %v1082 = vpop.f32.mrb[0].mxu0
      %1083 = vmatprep.mubr.f32.mxu0 0.0
      %1084 = vmatmul.mubr.f32.gmra.mrb[0].mxu0 %v870
      %v1085 = vpop.f32.mrb[0].mxu0
      %v1086 = vadd.f32 0.0, %v1085
      %v1087 = vpop.f32.mrb[0].mxu0
      %1088 = vmatprep.mubr.f32.mxu0 0.0
      %1089 = vmatmul.mubr.f32.gmra.mrb[0].mxu0 %v873
      %v1090 = vpop.f32.mrb[0].mxu0
      %v1091 = vadd.f32 0.0, %v1090
      %v1092 = vpop.f32.mrb[0].mxu0
      %1093 = vmatprep.mubr.f32.mxu0 0.0
      %1094 = vmatmul.mubr.f32.gmra.mrb[0].mxu0 %v876
      %v1095 = vpop.f32.mrb[0].mxu0
      %v1096 = vadd.f32 0.0, %v1095
      %v1097 = vpop.f32.mrb[0].mxu0
      %1098 = vmatprep.mubr.f32.mxu0 0.0
      %1099 = vmatmul.mubr.f32.gmra.mrb[0].mxu0 %v879
      %v1100 = vpop.f32.mrb[0].mxu0
      %v1101 = vadd.f32 0.0, %v1100
      %v1102 = vpop.f32.mrb[0].mxu0
      %1103 = vmatprep.mubr.f32.mxu0 0.0
      %1104 = vmatmul.mubr.f32.gmra.mrb[0].mxu0 %v882
      %v1105 = vpop.f32.mrb[0].mxu0
      %v1106 = vadd.f32 0.0, %v1105
      %v1107 = vpop.f32.mrb[0].mxu0
      %1108 = vdwg.mxu0
      %1109 = vmatprep.subr.mxu0 0.0
      %1110 = vmatpush1.msra.mxu0 %v951
      %1111 = vmatprep.subr.mxu0 0.0
      %1112 = vmatpush1.msra.mxu0 %v956
      %1113 = vmatprep.subr.mxu0 0.0
      %1114 = vmatpush1.msra.mxu0 %v961
      %1115 = vmatprep.subr.mxu0 0.0
      %1116 = vmatpush1.msra.mxu0 %v966
      %1117 = vmatprep.subr.mxu0 0.0
      %1118 = vmatpush1.msra.mxu0 %v971
      %1119 = vmatprep.subr.mxu0 0.0
      %1120 = vmatpush1.msra.mxu0 %v976
      %1121 = vmatprep.subr.mxu0 0.0
      %1122 = vmatpush1.msra.mxu0 %v981
      %1123 = vmatprep.subr.mxu0 0.0
      %1124 = vmatpush1.msra.mxu0 %v986
      %1125 = vmatprep.subr.mxu0 0.0
      %1126 = vmatpush1.msra.mxu0 %v991
      %1127 = vmatprep.subr.mxu0 0.0
      %1128 = vmatpush1.msra.mxu0 %v996
      %1129 = vmatprep.subr.mxu0 0.0
      %1130 = vmatpush1.msra.mxu0 %v1001
      %1131 = vmatprep.subr.mxu0 0.0
      %1132 = vmatpush1.msra.mxu0 %v1006
      %1133 = vmatprep.subr.mxu0 0.0
      %1134 = vmatpush1.msra.mxu0 %v1011
      %1135 = vmatprep.subr.mxu0 0.0
      %1136 = vmatpush1.msra.mxu0 %v1016
      %1137 = vmatprep.subr.mxu0 0.0
      %1138 = vmatpush1.msra.mxu0 %v1021
      %1139 = vmatprep.subr.mxu0 0.0
      %1140 = vmatpush1.msra.mxu0 %v1026
      %1141 = vmatprep.subr.mxu0 0.0
      %1142 = vmatpush1.msra.mxu0 %v1031
      %1143 = vmatprep.subr.mxu0 0.0
      %1144 = vmatpush1.msra.mxu0 %v1036
      %1145 = vmatprep.subr.mxu0 0.0
      %1146 = vmatpush1.msra.mxu0 %v1041
      %1147 = vmatprep.subr.mxu0 0.0
      %1148 = vmatpush1.msra.mxu0 %v1046
      %1149 = vmatprep.subr.mxu0 0.0
      %1150 = vmatpush1.msra.mxu0 %v1051
      %1151 = vmatprep.subr.mxu0 0.0
      %1152 = vmatpush1.msra.mxu0 %v1056
      %1153 = vmatprep.subr.mxu0 0.0
      %1154 = vmatpush1.msra.mxu0 %v1061
      %1155 = vmatprep.subr.mxu0 0.0
      %1156 = vmatpush1.msra.mxu0 %v1066
      %1157 = vmatprep.subr.mxu0 0.0
      %1158 = vmatpush1.msra.mxu0 %v1071
      %1159 = vmatprep.subr.mxu0 0.0
      %1160 = vmatpush1.msra.mxu0 %v1076
      %1161 = vmatprep.subr.mxu0 0.0
      %1162 = vmatpush1.msra.mxu0 %v1081
      %1163 = vmatprep.subr.mxu0 0.0
      %1164 = vmatpush1.msra.mxu0 %v1086
      %1165 = vmatprep.subr.mxu0 0.0
      %1166 = vmatpush1.msra.mxu0 %v1091
      %1167 = vmatprep.subr.mxu0 0.0
      %1168 = vmatpush1.msra.mxu0 %v1096
      %1169 = vmatprep.subr.mxu0 0.0
      %1170 = vmatpush1.msra.mxu0 %v1101
      %1171 = vmatprep.subr.mxu0 0.0
      %1172 = vmatpush1.msra.mxu0 %v1106
      %1173 = vmatprep.mubr.f32.mxu0 %v643
      %1174 = vmatmul.mubr.f32.gmra.mrb[0].mxu0 %v642
      %v1175 = vpop.f32.mrb[0].mxu0
      %v1176 = vadd.f32 0.0, %v1175
      %v1177 = vpop.f32.mrb[0].mxu0
      %1178 = vmatprep.mubr.f32.mxu0 %v645
      %1179 = vmatmul.mubr.f32.gmra.mrb[0].mxu0 %v644
      %v1180 = vpop.f32.mrb[0].mxu0
      %v1181 = vadd.f32 0.0, %v1180
      %v1182 = vpop.f32.mrb[0].mxu0
      %1183 = vmatprep.mubr.f32.mxu0 %v647
      %1184 = vmatmul.mubr.f32.gmra.mrb[0].mxu0 %v646
      %v1185 = vpop.f32.mrb[0].mxu0
      %v1186 = vadd.f32 0.0, %v1185
      %v1187 = vpop.f32.mrb[0].mxu0
      %1188 = vmatprep.mubr.f32.mxu0 %v649
      %1189 = vmatmul.mubr.f32.gmra.mrb[0].mxu0 %v648
      %v1190 = vpop.f32.mrb[0].mxu0
      %v1191 = vadd.f32 0.0, %v1190
      %v1192 = vpop.f32.mrb[0].mxu0
      %1193 = vmatprep.mubr.f32.mxu0 %v651
      %1194 = vmatmul.mubr.f32.gmra.mrb[0].mxu0 %v650
      %v1195 = vpop.f32.mrb[0].mxu0
      %v1196 = vadd.f32 0.0, %v1195
      %v1197 = vpop.f32.mrb[0].mxu0
      %1198 = vmatprep.mubr.f32.mxu0 %v653
      %1199 = vmatmul.mubr.f32.gmra.mrb[0].mxu0 %v652
      %v1200 = vpop.f32.mrb[0].mxu0
      %v1201 = vadd.f32 0.0, %v1200
      %v1202 = vpop.f32.mrb[0].mxu0
      %1203 = vmatprep.mubr.f32.mxu0 %v655
      %1204 = vmatmul.mubr.f32.gmra.mrb[0].mxu0 %v654
      %v1205 = vpop.f32.mrb[0].mxu0
      %v1206 = vadd.f32 0.0, %v1205
      %v1207 = vpop.f32.mrb[0].mxu0
      %1208 = vmatprep.mubr.f32.mxu0 %v657
      %1209 = vmatmul.mubr.f32.gmra.mrb[0].mxu0 %v656
      %v1210 = vpop.f32.mrb[0].mxu0
      %v1211 = vadd.f32 0.0, %v1210
      %v1212 = vpop.f32.mrb[0].mxu0
      %1213 = vmatprep.mubr.f32.mxu0 %v659
      %1214 = vmatmul.mubr.f32.gmra.mrb[0].mxu0 %v658
      %v1215 = vpop.f32.mrb[0].mxu0
      %v1216 = vadd.f32 0.0, %v1215
      %v1217 = vpop.f32.mrb[0].mxu0
      %1218 = vmatprep.mubr.f32.mxu0 %v661
      %1219 = vmatmul.mubr.f32.gmra.mrb[0].mxu0 %v660
      %v1220 = vpop.f32.mrb[0].mxu0
      %v1221 = vadd.f32 0.0, %v1220
      %v1222 = vpop.f32.mrb[0].mxu0
      %1223 = vmatprep.mubr.f32.mxu0 %v663
      %1224 = vmatmul.mubr.f32.gmra.mrb[0].mxu0 %v662
      %v1225 = vpop.f32.mrb[0].mxu0
      %v1226 = vadd.f32 0.0, %v1225
      %v1227 = vpop.f32.mrb[0].mxu0
      %1228 = vmatprep.mubr.f32.mxu0 %v665
      %1229 = vmatmul.mubr.f32.gmra.mrb[0].mxu0 %v664
      %v1230 = vpop.f32.mrb[0].mxu0
      %v1231 = vadd.f32 0.0, %v1230
      %v1232 = vpop.f32.mrb[0].mxu0
      %1233 = vmatprep.mubr.f32.mxu0 %v667
      %1234 = vmatmul.mubr.f32.gmra.mrb[0].mxu0 %v666
      %v1235 = vpop.f32.mrb[0].mxu0
      %v1236 = vadd.f32 0.0, %v1235
      %v1237 = vpop.f32.mrb[0].mxu0
      %1238 = vmatprep.mubr.f32.mxu0 %v669
      %1239 = vmatmul.mubr.f32.gmra.mrb[0].mxu0 %v668
      %v1240 = vpop.f32.mrb[0].mxu0
      %v1241 = vadd.f32 0.0, %v1240
      %v1242 = vpop.f32.mrb[0].mxu0
      %1243 = vmatprep.mubr.f32.mxu0 %v671
      %1244 = vmatmul.mubr.f32.gmra.mrb[0].mxu0 %v670
      %v1245 = vpop.f32.mrb[0].mxu0
      %v1246 = vadd.f32 0.0, %v1245
      %v1247 = vpop.f32.mrb[0].mxu0
      %1248 = vmatprep.mubr.f32.mxu0 %v673
      %1249 = vmatmul.mubr.f32.gmra.mrb[0].mxu0 %v672
      %v1250 = vpop.f32.mrb[0].mxu0
      %v1251 = vadd.f32 0.0, %v1250
      %v1252 = vpop.f32.mrb[0].mxu0
      %1253 = vdwg.mxu0
      %v1254 = vmax.f32 %v1176, 0.0
      %v1255 = vmax.f32 %v1181, 0.0
      %v1256 = vmax.f32 %v1186, 0.0
      %v1257 = vmax.f32 %v1191, 0.0
      %v1258 = vmax.f32 %v1196, 0.0
      %v1259 = vmax.f32 %v1201, 0.0
      %v1260 = vmax.f32 %v1206, 0.0
      %v1261 = vmax.f32 %v1211, 0.0
      %v1262 = vmax.f32 %v1216, 0.0
      %v1263 = vmax.f32 %v1221, 0.0
      %v1264 = vmax.f32 %v1226, 0.0
      %v1265 = vmax.f32 %v1231, 0.0
      %v1266 = vmax.f32 %v1236, 0.0
      %v1267 = vmax.f32 %v1241, 0.0
      %v1268 = vmax.f32 %v1246, 0.0
      %v1269 = vmax.f32 %v1251, 0.0
      %1286 = vrot.lane.b32.xlu0 %v1254, 64
      %v1287 = vpop.permute.xlu0 %1286
      %1288 = vrot.lane.b32.xlu0 %v1255, 64
      %v1289 = vpop.permute.xlu0 %1288
      %1290 = vrot.lane.b32.xlu0 %v1256, 64
      %v1291 = vpop.permute.xlu0 %1290
      %1292 = vrot.lane.b32.xlu0 %v1257, 64
      %v1293 = vpop.permute.xlu0 %1292
      %1294 = vrot.lane.b32.xlu0 %v1258, 64
      %v1295 = vpop.permute.xlu0 %1294
      %1296 = vrot.lane.b32.xlu0 %v1259, 64
      %v1297 = vpop.permute.xlu0 %1296
      %1298 = vrot.lane.b32.xlu0 %v1260, 64
      %v1299 = vpop.permute.xlu0 %1298
      %1300 = vrot.lane.b32.xlu0 %v1261, 64
      %v1301 = vpop.permute.xlu0 %1300
      %1302 = vrot.lane.b32.xlu0 %v1262, 64
      %v1303 = vpop.permute.xlu0 %1302
      %1304 = vrot.lane.b32.xlu0 %v1263, 64
      %v1305 = vpop.permute.xlu0 %1304
      %1306 = vrot.lane.b32.xlu0 %v1264, 64
      %v1307 = vpop.permute.xlu0 %1306
      %1308 = vrot.lane.b32.xlu0 %v1265, 64
      %v1309 = vpop.permute.xlu0 %1308
      %1310 = vrot.lane.b32.xlu0 %v1266, 64
      %v1311 = vpop.permute.xlu0 %1310
      %1312 = vrot.lane.b32.xlu0 %v1267, 64
      %v1313 = vpop.permute.xlu0 %1312
      %1314 = vrot.lane.b32.xlu0 %v1268, 64
      %v1315 = vpop.permute.xlu0 %1314
      %1316 = vrot.lane.b32.xlu0 %v1269, 64
      %v1317 = vpop.permute.xlu0 %1316
      %vm1334 = vcmask 1048064
      %1335 = vst.msk [vmem:[#allocation2] sm:$0xff] %vm1334, %v1287
      %1336 = vst.msk [vmem:[#allocation2 + $0x8] sm:$0xff] %vm1334, %v1289
      %1337 = vst.msk [vmem:[#allocation2 + $0x10] sm:$0xff] %vm1334, %v1291
      %1338 = vst.msk [vmem:[#allocation2 + $0x18] sm:$0xff] %vm1334, %v1293
      %1339 = vst.msk [vmem:[#allocation2 + $0x20] sm:$0xff] %vm1334, %v1295
      %1340 = vst.msk [vmem:[#allocation2 + $0x28] sm:$0xff] %vm1334, %v1297
      %1341 = vst.msk [vmem:[#allocation2 + $0x30] sm:$0xff] %vm1334, %v1299
      %1342 = vst.msk [vmem:[#allocation2 + $0x38] sm:$0xff] %vm1334, %v1301
      %1343 = vst.msk [vmem:[#allocation2 + $0x40] sm:$0xff] %vm1334, %v1303
      %1344 = vst.msk [vmem:[#allocation2 + $0x48] sm:$0xff] %vm1334, %v1305
      %1345 = vst.msk [vmem:[#allocation2 + $0x50] sm:$0xff] %vm1334, %v1307
      %1346 = vst.msk [vmem:[#allocation2 + $0x58] sm:$0xff] %vm1334, %v1309
      %1347 = vst.msk [vmem:[#allocation2 + $0x60] sm:$0xff] %vm1334, %v1311
      %1348 = vst.msk [vmem:[#allocation2 + $0x68] sm:$0xff] %vm1334, %v1313
      %1349 = vst.msk [vmem:[#allocation2 + $0x70] sm:$0xff] %vm1334, %v1315
      %1350 = vst.msk [vmem:[#allocation2 + $0x78] sm:$0xff] %vm1334, %v1317
      %s1351 = sld [smem:[#allocation4]]
      %1352 = vmatprep.subr.mxu0 0.0
      %1353 = vmatpush1.msra.mxu0 %v626
      %1354 = vmatprep.subr.mxu0 0.0
      %1355 = vmatpush1.msra.mxu0 %v627
      %1356 = vmatprep.subr.mxu0 0.0
      %1357 = vmatpush1.msra.mxu0 %v628
      %1358 = vmatprep.subr.mxu0 0.0
      %1359 = vmatpush1.msra.mxu0 %v629
      %1360 = vmatprep.subr.mxu0 0.0
      %1361 = vmatpush1.msra.mxu0 %v630
      %1362 = vmatprep.subr.mxu0 0.0
      %1363 = vmatpush1.msra.mxu0 %v631
      %1364 = vmatprep.subr.mxu0 0.0
      %1365 = vmatpush1.msra.mxu0 %v632
      %1366 = vmatprep.subr.mxu0 0.0
      %1367 = vmatpush1.msra.mxu0 %v633
      %1368 = vmatprep.subr.mxu0 0.0
      %1369 = vmatpush1.msra.mxu0 %v634
      %1370 = vmatprep.subr.mxu0 0.0
      %1371 = vmatpush1.msra.mxu0 %v635
      %1372 = vmatprep.subr.mxu0 0.0
      %1373 = vmatpush1.msra.mxu0 %v636
      %1374 = vmatprep.subr.mxu0 0.0
      %1375 = vmatpush1.msra.mxu0 %v637
      %1376 = vmatprep.subr.mxu0 0.0
      %1377 = vmatpush1.msra.mxu0 %v638
      %1378 = vmatprep.subr.mxu0 0.0
      %1379 = vmatpush1.msra.mxu0 %v639
      %1380 = vmatprep.subr.mxu0 0.0
      %1381 = vmatpush1.msra.mxu0 %v640
      %1382 = vmatprep.subr.mxu0 0.0
      %1383 = vmatpush1.msra.mxu0 %v641
      %1384 = vmatprep.subr.mxu0 0.0
      %1385 = vmatpush1.msra.mxu0 0.0
      %1386 = vmatprep.subr.mxu0 0.0
      %1387 = vmatpush1.msra.mxu0 0.0
      %1388 = vmatprep.subr.mxu0 0.0
      %1389 = vmatpush1.msra.mxu0 0.0
      %1390 = vmatprep.subr.mxu0 0.0
      %1391 = vmatpush1.msra.mxu0 0.0
      %1392 = vmatprep.subr.mxu0 0.0
      %1393 = vmatpush1.msra.mxu0 0.0
      %1394 = vmatprep.subr.mxu0 0.0
      %1395 = vmatpush1.msra.mxu0 0.0
      %1396 = vmatprep.subr.mxu0 0.0
      %1397 = vmatpush1.msra.mxu0 0.0
      %1398 = vmatprep.subr.mxu0 0.0
      %1399 = vmatpush1.msra.mxu0 0.0
      %1400 = vmatprep.subr.mxu0 0.0
      %1401 = vmatpush1.msra.mxu0 0.0
      %1402 = vmatprep.subr.mxu0 0.0
      %1403 = vmatpush1.msra.mxu0 0.0
      %1404 = vmatprep.subr.mxu0 0.0
      %1405 = vmatpush1.msra.mxu0 0.0
      %1406 = vmatprep.subr.mxu0 0.0
      %1407 = vmatpush1.msra.mxu0 0.0
      %1408 = vmatprep.subr.mxu0 0.0
      %1409 = vmatpush1.msra.mxu0 0.0
      %1410 = vmatprep.subr.mxu0 0.0
      %1411 = vmatpush1.msra.mxu0 0.0
      %1412 = vmatprep.subr.mxu0 0.0
      %1413 = vmatpush1.msra.mxu0 0.0
      %1414 = vmatprep.subr.mxu0 0.0
      %1415 = vmatpush1.msra.mxu0 0.0
      %1416 = vmatprep.mubr.f32.mxu0 0.0
      %1417 = vmatmul.mubr.f32.gmra.mrb[0].mxu0 %v738
      %v1418 = vpop.f32.mrb[0].mxu0
      %v1419 = vadd.f32 0.0, %v1418
      %v1420 = vpop.f32.mrb[0].mxu0
      %1421 = vmatprep.mubr.f32.mxu0 0.0
      %1422 = vmatmul.mubr.f32.gmra.mrb[0].mxu0 %v739
      %v1423 = vpop.f32.mrb[0].mxu0
      %v1424 = vadd.f32 0.0, %v1423
      %v1425 = vpop.f32.mrb[0].mxu0
      %1426 = vmatprep.mubr.f32.mxu0 0.0
      %1427 = vmatmul.mubr.f32.gmra.mrb[0].mxu0 %v740
      %v1428 = vpop.f32.mrb[0].mxu0
      %v1429 = vadd.f32 0.0, %v1428
      %v1430 = vpop.f32.mrb[0].mxu0
      %1431 = vmatprep.mubr.f32.mxu0 0.0
      %1432 = vmatmul.mubr.f32.gmra.mrb[0].mxu0 %v741
      %v1433 = vpop.f32.mrb[0].mxu0
      %v1434 = vadd.f32 0.0, %v1433
      %v1435 = vpop.f32.mrb[0].mxu0
      %1436 = vmatprep.mubr.f32.mxu0 0.0
      %1437 = vmatmul.mubr.f32.gmra.mrb[0].mxu0 %v742
      %v1438 = vpop.f32.mrb[0].mxu0
      %v1439 = vadd.f32 0.0, %v1438
      %v1440 = vpop.f32.mrb[0].mxu0
      %1441 = vmatprep.mubr.f32.mxu0 0.0
      %1442 = vmatmul.mubr.f32.gmra.mrb[0].mxu0 %v743
      %v1443 = vpop.f32.mrb[0].mxu0
      %v1444 = vadd.f32 0.0, %v1443
      %v1445 = vpop.f32.mrb[0].mxu0
      %1446 = vmatprep.mubr.f32.mxu0 0.0
      %1447 = vmatmul.mubr.f32.gmra.mrb[0].mxu0 %v744
      %v1448 = vpop.f32.mrb[0].mxu0
      %v1449 = vadd.f32 0.0, %v1448
      %v1450 = vpop.f32.mrb[0].mxu0
      %1451 = vmatprep.mubr.f32.mxu0 0.0
      %1452 = vmatmul.mubr.f32.gmra.mrb[0].mxu0 %v745
      %v1453 = vpop.f32.mrb[0].mxu0
      %v1454 = vadd.f32 0.0, %v1453
      %v1455 = vpop.f32.mrb[0].mxu0
      %1456 = vmatprep.mubr.f32.mxu0 0.0
      %1457 = vmatmul.mubr.f32.gmra.mrb[0].mxu0 %v746
      %v1458 = vpop.f32.mrb[0].mxu0
      %v1459 = vadd.f32 0.0, %v1458
      %v1460 = vpop.f32.mrb[0].mxu0
      %1461 = vmatprep.mubr.f32.mxu0 0.0
      %1462 = vmatmul.mubr.f32.gmra.mrb[0].mxu0 %v747
      %v1463 = vpop.f32.mrb[0].mxu0
      %v1464 = vadd.f32 0.0, %v1463
      %v1465 = vpop.f32.mrb[0].mxu0
      %1466 = vmatprep.mubr.f32.mxu0 0.0
      %1467 = vmatmul.mubr.f32.gmra.mrb[0].mxu0 %v748
      %v1468 = vpop.f32.mrb[0].mxu0
      %v1469 = vadd.f32 0.0, %v1468
      %v1470 = vpop.f32.mrb[0].mxu0
      %1471 = vmatprep.mubr.f32.mxu0 0.0
      %1472 = vmatmul.mubr.f32.gmra.mrb[0].mxu0 %v749
      %v1473 = vpop.f32.mrb[0].mxu0
      %v1474 = vadd.f32 0.0, %v1473
      %v1475 = vpop.f32.mrb[0].mxu0
      %1476 = vmatprep.mubr.f32.mxu0 0.0
      %1477 = vmatmul.mubr.f32.gmra.mrb[0].mxu0 %v750
      %v1478 = vpop.f32.mrb[0].mxu0
      %v1479 = vadd.f32 0.0, %v1478
      %v1480 = vpop.f32.mrb[0].mxu0
      %1481 = vmatprep.mubr.f32.mxu0 0.0
      %1482 = vmatmul.mubr.f32.gmra.mrb[0].mxu0 %v751
      %v1483 = vpop.f32.mrb[0].mxu0
      %v1484 = vadd.f32 0.0, %v1483
      %v1485 = vpop.f32.mrb[0].mxu0
      %1486 = vmatprep.mubr.f32.mxu0 0.0
      %1487 = vmatmul.mubr.f32.gmra.mrb[0].mxu0 %v752
      %v1488 = vpop.f32.mrb[0].mxu0
      %v1489 = vadd.f32 0.0, %v1488
      %v1490 = vpop.f32.mrb[0].mxu0
      %1491 = vmatprep.mubr.f32.mxu0 0.0
      %1492 = vmatmul.mubr.f32.gmra.mrb[0].mxu0 %v753
      %v1493 = vpop.f32.mrb[0].mxu0
      %v1494 = vadd.f32 0.0, %v1493
      %v1495 = vpop.f32.mrb[0].mxu0
      %1496 = vdwg.mxu0
      %vm1497 = vcmask 523264
      %1498 = vst.msk [vmem:[#allocation2] sm:$0xff] %vm1497, %v1419
      %1499 = vst.msk [vmem:[#allocation2 + $0x8] sm:$0xff] %vm1497, %v1424
      %1500 = vst.msk [vmem:[#allocation2 + $0x10] sm:$0xff] %vm1497, %v1429
      %1501 = vst.msk [vmem:[#allocation2 + $0x18] sm:$0xff] %vm1497, %v1434
      %1502 = vst.msk [vmem:[#allocation2 + $0x20] sm:$0xff] %vm1497, %v1439
      %1503 = vst.msk [vmem:[#allocation2 + $0x28] sm:$0xff] %vm1497, %v1444
      %1504 = vst.msk [vmem:[#allocation2 + $0x30] sm:$0xff] %vm1497, %v1449
      %1505 = vst.msk [vmem:[#allocation2 + $0x38] sm:$0xff] %vm1497, %v1454
      %1506 = vst.msk [vmem:[#allocation2 + $0x40] sm:$0xff] %vm1497, %v1459
      %1507 = vst.msk [vmem:[#allocation2 + $0x48] sm:$0xff] %vm1497, %v1464
      %1508 = vst.msk [vmem:[#allocation2 + $0x50] sm:$0xff] %vm1497, %v1469
      %1509 = vst.msk [vmem:[#allocation2 + $0x58] sm:$0xff] %vm1497, %v1474
      %1510 = vst.msk [vmem:[#allocation2 + $0x60] sm:$0xff] %vm1497, %v1479
      %1511 = vst.msk [vmem:[#allocation2 + $0x68] sm:$0xff] %vm1497, %v1484
      %1512 = vst.msk [vmem:[#allocation2 + $0x70] sm:$0xff] %vm1497, %v1489
      %1513 = vst.msk [vmem:[#allocation2 + $0x78] sm:$0xff] %vm1497, %v1494
      %v1514 = vld [vmem:[#allocation2] sm:$0xff]
      %v1515 = vld [vmem:[#allocation2 + $0x8] sm:$0xff]
      %v1516 = vld [vmem:[#allocation2 + $0x10] sm:$0xff]
      %v1517 = vld [vmem:[#allocation2 + $0x18] sm:$0xff]
      %v1518 = vld [vmem:[#allocation2 + $0x20] sm:$0xff]
      %v1519 = vld [vmem:[#allocation2 + $0x28] sm:$0xff]
      %v1520 = vld [vmem:[#allocation2 + $0x30] sm:$0xff]
      %v1521 = vld [vmem:[#allocation2 + $0x38] sm:$0xff]
      %v1522 = vld [vmem:[#allocation2 + $0x40] sm:$0xff]
      %v1523 = vld [vmem:[#allocation2 + $0x48] sm:$0xff]
      %v1524 = vld [vmem:[#allocation2 + $0x50] sm:$0xff]
      %v1525 = vld [vmem:[#allocation2 + $0x58] sm:$0xff]
      %v1526 = vld [vmem:[#allocation2 + $0x60] sm:$0xff]
      %v1527 = vld [vmem:[#allocation2 + $0x68] sm:$0xff]
      %v1528 = vld [vmem:[#allocation2 + $0x70] sm:$0xff]
      %v1529 = vld [vmem:[#allocation2 + $0x78] sm:$0xff]
      %v1530 = vld [vmem:[%s8] sm:$0xff]
      %v1531 = vld [vmem:[%s8 + $0x8] sm:$0xff]
      %v1532 = vld [vmem:[%s8 + $0x10] sm:$0xff]
      %v1533 = vld [vmem:[%s8 + $0x18] sm:$0xff]
      %v1534 = vld [vmem:[%s8 + $0x20] sm:$0xff]
      %v1535 = vld [vmem:[%s8 + $0x28] sm:$0xff]
      %v1536 = vld [vmem:[%s8 + $0x30] sm:$0xff]
      %v1537 = vld [vmem:[%s8 + $0x38] sm:$0xff]
      %v1538 = vld [vmem:[%s8 + $0x40] sm:$0xff]
      %v1539 = vld [vmem:[%s8 + $0x48] sm:$0xff]
      %v1540 = vld [vmem:[%s8 + $0x50] sm:$0xff]
      %v1541 = vld [vmem:[%s8 + $0x58] sm:$0xff]
      %v1542 = vld [vmem:[%s8 + $0x60] sm:$0xff]
      %v1543 = vld [vmem:[%s8 + $0x68] sm:$0xff]
      %v1544 = vld [vmem:[%s8 + $0x70] sm:$0xff]
      %v1545 = vld [vmem:[%s8 + $0x78] sm:$0xff]
      %1546 = vmatprep.subr.mxu0 0.0
      %1547 = vmatpush1.msra.mxu0 %v1530
      %1548 = vmatprep.subr.mxu0 0.0
      %1549 = vmatpush1.msra.mxu0 %v1531
      %1550 = vmatprep.subr.mxu0 0.0
      %1551 = vmatpush1.msra.mxu0 %v1532
      %1552 = vmatprep.subr.mxu0 0.0
      %1553 = vmatpush1.msra.mxu0 %v1533
      %1554 = vmatprep.subr.mxu0 0.0
      %1555 = vmatpush1.msra.mxu0 %v1534
      %1556 = vmatprep.subr.mxu0 0.0
      %1557 = vmatpush1.msra.mxu0 %v1535
      %1558 = vmatprep.subr.mxu0 0.0
      %1559 = vmatpush1.msra.mxu0 %v1536
      %1560 = vmatprep.subr.mxu0 0.0
      %1561 = vmatpush1.msra.mxu0 %v1537
      %1562 = vmatprep.subr.mxu0 0.0
      %1563 = vmatpush1.msra.mxu0 %v1538
      %1564 = vmatprep.subr.mxu0 0.0
      %1565 = vmatpush1.msra.mxu0 %v1539
      %1566 = vmatprep.subr.mxu0 0.0
      %1567 = vmatpush1.msra.mxu0 %v1540
      %1568 = vmatprep.subr.mxu0 0.0
      %1569 = vmatpush1.msra.mxu0 %v1541
      %1570 = vmatprep.subr.mxu0 0.0
      %1571 = vmatpush1.msra.mxu0 %v1542
      %1572 = vmatprep.subr.mxu0 0.0
      %1573 = vmatpush1.msra.mxu0 %v1543
      %1574 = vmatprep.subr.mxu0 0.0
      %1575 = vmatpush1.msra.mxu0 %v1544
      %1576 = vmatprep.subr.mxu0 0.0
      %1577 = vmatpush1.msra.mxu0 %v1545
      %1578 = vmatprep.subr.mxu0 0.0
      %1579 = vmatpush1.msra.mxu0 0.0
      %1580 = vmatprep.subr.mxu0 0.0
      %1581 = vmatpush1.msra.mxu0 0.0
      %1582 = vmatprep.subr.mxu0 0.0
      %1583 = vmatpush1.msra.mxu0 0.0
      %1584 = vmatprep.subr.mxu0 0.0
      %1585 = vmatpush1.msra.mxu0 0.0
      %1586 = vmatprep.subr.mxu0 0.0
      %1587 = vmatpush1.msra.mxu0 0.0
      %1588 = vmatprep.subr.mxu0 0.0
      %1589 = vmatpush1.msra.mxu0 0.0
      %1590 = vmatprep.subr.mxu0 0.0
      %1591 = vmatpush1.msra.mxu0 0.0
      %1592 = vmatprep.subr.mxu0 0.0
      %1593 = vmatpush1.msra.mxu0 0.0
      %1594 = vmatprep.subr.mxu0 0.0
      %1595 = vmatpush1.msra.mxu0 0.0
      %1596 = vmatprep.subr.mxu0 0.0
      %1597 = vmatpush1.msra.mxu0 0.0
      %1598 = vmatprep.subr.mxu0 0.0
      %1599 = vmatpush1.msra.mxu0 0.0
      %1600 = vmatprep.subr.mxu0 0.0
      %1601 = vmatpush1.msra.mxu0 0.0
      %1602 = vmatprep.subr.mxu0 0.0
      %1603 = vmatpush1.msra.mxu0 0.0
      %1604 = vmatprep.subr.mxu0 0.0
      %1605 = vmatpush1.msra.mxu0 0.0
      %1606 = vmatprep.subr.mxu0 0.0
      %1607 = vmatpush1.msra.mxu0 0.0
      %1608 = vmatprep.subr.mxu0 0.0
      %1609 = vmatpush1.msra.mxu0 0.0
      %1610 = vmatprep.mubr.f32.mxu0 0.0
      %1611 = vmatmul.mubr.f32.gmra.mrb[0].mxu0 %v1514
      %v1612 = vpop.f32.mrb[0].mxu0
      %v1613 = vadd.f32 0.0, %v1612
      %v1614 = vpop.f32.mrb[0].mxu0
      %1615 = vmatprep.mubr.f32.mxu0 0.0
      %1616 = vmatmul.mubr.f32.gmra.mrb[0].mxu0 %v1515
      %v1617 = vpop.f32.mrb[0].mxu0
      %v1618 = vadd.f32 0.0, %v1617
      %v1619 = vpop.f32.mrb[0].mxu0
      %1620 = vmatprep.mubr.f32.mxu0 0.0
      %1621 = vmatmul.mubr.f32.gmra.mrb[0].mxu0 %v1516
      %v1622 = vpop.f32.mrb[0].mxu0
      %v1623 = vadd.f32 0.0, %v1622
      %v1624 = vpop.f32.mrb[0].mxu0
      %1625 = vmatprep.mubr.f32.mxu0 0.0
      %1626 = vmatmul.mubr.f32.gmra.mrb[0].mxu0 %v1517
      %v1627 = vpop.f32.mrb[0].mxu0
      %v1628 = vadd.f32 0.0, %v1627
      %v1629 = vpop.f32.mrb[0].mxu0
      %1630 = vmatprep.mubr.f32.mxu0 0.0
      %1631 = vmatmul.mubr.f32.gmra.mrb[0].mxu0 %v1518
      %v1632 = vpop.f32.mrb[0].mxu0
      %v1633 = vadd.f32 0.0, %v1632
      %v1634 = vpop.f32.mrb[0].mxu0
      %1635 = vmatprep.mubr.f32.mxu0 0.0
      %1636 = vmatmul.mubr.f32.gmra.mrb[0].mxu0 %v1519
      %v1637 = vpop.f32.mrb[0].mxu0
      %v1638 = vadd.f32 0.0, %v1637
      %v1639 = vpop.f32.mrb[0].mxu0
      %1640 = vmatprep.mubr.f32.mxu0 0.0
      %1641 = vmatmul.mubr.f32.gmra.mrb[0].mxu0 %v1520
      %v1642 = vpop.f32.mrb[0].mxu0
      %v1643 = vadd.f32 0.0, %v1642
      %v1644 = vpop.f32.mrb[0].mxu0
      %1645 = vmatprep.mubr.f32.mxu0 0.0
      %1646 = vmatmul.mubr.f32.gmra.mrb[0].mxu0 %v1521
      %v1647 = vpop.f32.mrb[0].mxu0
      %v1648 = vadd.f32 0.0, %v1647
      %v1649 = vpop.f32.mrb[0].mxu0
      %1650 = vmatprep.mubr.f32.mxu0 0.0
      %1651 = vmatmul.mubr.f32.gmra.mrb[0].mxu0 %v1522
      %v1652 = vpop.f32.mrb[0].mxu0
      %v1653 = vadd.f32 0.0, %v1652
      %v1654 = vpop.f32.mrb[0].mxu0
      %1655 = vmatprep.mubr.f32.mxu0 0.0
      %1656 = vmatmul.mubr.f32.gmra.mrb[0].mxu0 %v1523
      %v1657 = vpop.f32.mrb[0].mxu0
      %v1658 = vadd.f32 0.0, %v1657
      %v1659 = vpop.f32.mrb[0].mxu0
      %1660 = vmatprep.mubr.f32.mxu0 0.0
      %1661 = vmatmul.mubr.f32.gmra.mrb[0].mxu0 %v1524
      %v1662 = vpop.f32.mrb[0].mxu0
      %v1663 = vadd.f32 0.0, %v1662
      %v1664 = vpop.f32.mrb[0].mxu0
      %1665 = vmatprep.mubr.f32.mxu0 0.0
      %1666 = vmatmul.mubr.f32.gmra.mrb[0].mxu0 %v1525
      %v1667 = vpop.f32.mrb[0].mxu0
      %v1668 = vadd.f32 0.0, %v1667
      %v1669 = vpop.f32.mrb[0].mxu0
      %1670 = vmatprep.mubr.f32.mxu0 0.0
      %1671 = vmatmul.mubr.f32.gmra.mrb[0].mxu0 %v1526
      %v1672 = vpop.f32.mrb[0].mxu0
      %v1673 = vadd.f32 0.0, %v1672
      %v1674 = vpop.f32.mrb[0].mxu0
      %1675 = vmatprep.mubr.f32.mxu0 0.0
      %1676 = vmatmul.mubr.f32.gmra.mrb[0].mxu0 %v1527
      %v1677 = vpop.f32.mrb[0].mxu0
      %v1678 = vadd.f32 0.0, %v1677
      %v1679 = vpop.f32.mrb[0].mxu0
      %1680 = vmatprep.mubr.f32.mxu0 0.0
      %1681 = vmatmul.mubr.f32.gmra.mrb[0].mxu0 %v1528
      %v1682 = vpop.f32.mrb[0].mxu0
      %v1683 = vadd.f32 0.0, %v1682
      %v1684 = vpop.f32.mrb[0].mxu0
      %1685 = vmatprep.mubr.f32.mxu0 0.0
      %1686 = vmatmul.mubr.f32.gmra.mrb[0].mxu0 %v1529
      %v1687 = vpop.f32.mrb[0].mxu0
      %v1688 = vadd.f32 0.0, %v1687
      %v1689 = vpop.f32.mrb[0].mxu0
      %1690 = vdwg.mxu0
      %v1691 = vmul.f32 %v1419, 0.9
      %v1692 = vmul.f32 %v1424, 0.9
      %v1693 = vmul.f32 %v1429, 0.9
      %v1694 = vmul.f32 %v1434, 0.9
      %v1695 = vmul.f32 %v1439, 0.9
      %v1696 = vmul.f32 %v1444, 0.9
      %v1697 = vmul.f32 %v1449, 0.9
      %v1698 = vmul.f32 %v1454, 0.9
      %v1699 = vmul.f32 %v1459, 0.9
      %v1700 = vmul.f32 %v1464, 0.9
      %v1701 = vmul.f32 %v1469, 0.9
      %v1702 = vmul.f32 %v1474, 0.9
      %v1703 = vmul.f32 %v1479, 0.9
      %v1704 = vmul.f32 %v1484, 0.9
      %v1705 = vmul.f32 %v1489, 0.9
      %v1706 = vmul.f32 %v1494, 0.9
      %v1707 = vmul.f32 %v1254, 0.1
      %v1708 = vmul.f32 %v1255, 0.1
      %v1709 = vmul.f32 %v1256, 0.1
      %v1710 = vmul.f32 %v1257, 0.1
      %v1711 = vmul.f32 %v1258, 0.1
      %v1712 = vmul.f32 %v1259, 0.1
      %v1713 = vmul.f32 %v1260, 0.1
      %v1714 = vmul.f32 %v1261, 0.1
      %v1715 = vmul.f32 %v1262, 0.1
      %v1716 = vmul.f32 %v1263, 0.1
      %v1717 = vmul.f32 %v1264, 0.1
      %v1718 = vmul.f32 %v1265, 0.1
      %v1719 = vmul.f32 %v1266, 0.1
      %v1720 = vmul.f32 %v1267, 0.1
      %v1721 = vmul.f32 %v1268, 0.1
      %v1722 = vmul.f32 %v1269, 0.1
      %v1723 = vadd.f32 %v1691, %v1707
      %v1724 = vadd.f32 %v1692, %v1708
      %v1725 = vadd.f32 %v1693, %v1709
      %v1726 = vadd.f32 %v1694, %v1710
      %v1727 = vadd.f32 %v1695, %v1711
      %v1728 = vadd.f32 %v1696, %v1712
      %v1729 = vadd.f32 %v1697, %v1713
      %v1730 = vadd.f32 %v1698, %v1714
      %v1731 = vadd.f32 %v1699, %v1715
      %v1732 = vadd.f32 %v1700, %v1716
      %v1733 = vadd.f32 %v1701, %v1717
      %v1734 = vadd.f32 %v1702, %v1718
      %v1735 = vadd.f32 %v1703, %v1719
      %v1736 = vadd.f32 %v1704, %v1720
      %v1737 = vadd.f32 %v1705, %v1721
      %v1738 = vadd.f32 %v1706, %v1722
      %v1739 = vstv %s1351
      %v1740 = vmul.f32 %v1739, %v1613
      %v1741 = vmul.f32 %v1739, %v1618
      %v1742 = vmul.f32 %v1739, %v1623
      %v1743 = vmul.f32 %v1739, %v1628
      %v1744 = vmul.f32 %v1739, %v1633
      %v1745 = vmul.f32 %v1739, %v1638
      %v1746 = vmul.f32 %v1739, %v1643
      %v1747 = vmul.f32 %v1739, %v1648
      %v1748 = vmul.f32 %v1739, %v1653
      %v1749 = vmul.f32 %v1739, %v1658
      %v1750 = vmul.f32 %v1739, %v1663
      %v1751 = vmul.f32 %v1739, %v1668
      %v1752 = vmul.f32 %v1739, %v1673
      %v1753 = vmul.f32 %v1739, %v1678
      %v1754 = vmul.f32 %v1739, %v1683
      %v1755 = vmul.f32 %v1739, %v1688
      %s1756 = ssub.f32 1.0, %s1351
      %v1757 = vstv %s1756
      %v1758 = vmul.f32 %v1757, %v1723
      %v1759 = vmul.f32 %v1757, %v1724
      %v1760 = vmul.f32 %v1757, %v1725
      %v1761 = vmul.f32 %v1757, %v1726
      %v1762 = vmul.f32 %v1757, %v1727
      %v1763 = vmul.f32 %v1757, %v1728
      %v1764 = vmul.f32 %v1757, %v1729
      %v1765 = vmul.f32 %v1757, %v1730
      %v1766 = vmul.f32 %v1757, %v1731
      %v1767 = vmul.f32 %v1757, %v1732
      %v1768 = vmul.f32 %v1757, %v1733
      %v1769 = vmul.f32 %v1757, %v1734
      %v1770 = vmul.f32 %v1757, %v1735
      %v1771 = vmul.f32 %v1757, %v1736
      %v1772 = vmul.f32 %v1757, %v1737
      %v1773 = vmul.f32 %v1757, %v1738
      %v1774 = vadd.f32 %v1740, %v1758
      %v1775 = vadd.f32 %v1741, %v1759
      %v1776 = vadd.f32 %v1742, %v1760
      %v1777 = vadd.f32 %v1743, %v1761
      %v1778 = vadd.f32 %v1744, %v1762
      %v1779 = vadd.f32 %v1745, %v1763
      %v1780 = vadd.f32 %v1746, %v1764
      %v1781 = vadd.f32 %v1747, %v1765
      %v1782 = vadd.f32 %v1748, %v1766
      %v1783 = vadd.f32 %v1749, %v1767
      %v1784 = vadd.f32 %v1750, %v1768
      %v1785 = vadd.f32 %v1751, %v1769
      %v1786 = vadd.f32 %v1752, %v1770
      %v1787 = vadd.f32 %v1753, %v1771
      %v1788 = vadd.f32 %v1754, %v1772
      %v1789 = vadd.f32 %v1755, %v1773
      %v1790 = vmax.f32 %v1774, 0.0
      %v1791 = vmax.f32 %v1775, 0.0
      %v1792 = vmax.f32 %v1776, 0.0
      %v1793 = vmax.f32 %v1777, 0.0
      %v1794 = vmax.f32 %v1778, 0.0
      %v1795 = vmax.f32 %v1779, 0.0
      %v1796 = vmax.f32 %v1780, 0.0
      %v1797 = vmax.f32 %v1781, 0.0
      %v1798 = vmax.f32 %v1782, 0.0
      %v1799 = vmax.f32 %v1783, 0.0
      %v1800 = vmax.f32 %v1784, 0.0
      %v1801 = vmax.f32 %v1785, 0.0
      %v1802 = vmax.f32 %v1786, 0.0
      %v1803 = vmax.f32 %v1787, 0.0
      %v1804 = vmax.f32 %v1788, 0.0
      %v1805 = vmax.f32 %v1789, 0.0
      %s1806 = sld [smem:[#allocation4 + $0x1]]
      %1807 = vmatprep.subr.mxu0 0.0
      %1808 = vmatpush1.msra.mxu0 %v1790
      %1809 = vmatprep.subr.mxu0 0.0
      %1810 = vmatpush1.msra.mxu0 %v1791
      %1811 = vmatprep.subr.mxu0 0.0
      %1812 = vmatpush1.msra.mxu0 %v1792
      %1813 = vmatprep.subr.mxu0 0.0
      %1814 = vmatpush1.msra.mxu0 %v1793
      %1815 = vmatprep.subr.mxu0 0.0
      %1816 = vmatpush1.msra.mxu0 %v1794
      %1817 = vmatprep.subr.mxu0 0.0
      %1818 = vmatpush1.msra.mxu0 %v1795
      %1819 = vmatprep.subr.mxu0 0.0
      %1820 = vmatpush1.msra.mxu0 %v1796
      %1821 = vmatprep.subr.mxu0 0.0
      %1822 = vmatpush1.msra.mxu0 %v1797
      %1823 = vmatprep.subr.mxu0 0.0
      %1824 = vmatpush1.msra.mxu0 %v1798
      %1825 = vmatprep.subr.mxu0 0.0
      %1826 = vmatpush1.msra.mxu0 %v1799
      %1827 = vmatprep.subr.mxu0 0.0
      %1828 = vmatpush1.msra.mxu0 %v1800
      %1829 = vmatprep.subr.mxu0 0.0
      %1830 = vmatpush1.msra.mxu0 %v1801
      %1831 = vmatprep.subr.mxu0 0.0
      %1832 = vmatpush1.msra.mxu0 %v1802
      %1833 = vmatprep.subr.mxu0 0.0
      %1834 = vmatpush1.msra.mxu0 %v1803
      %1835 = vmatprep.subr.mxu0 0.0
      %1836 = vmatpush1.msra.mxu0 %v1804
      %1837 = vmatprep.subr.mxu0 0.0
      %1838 = vmatpush1.msra.mxu0 %v1805
      %1839 = vmatprep.subr.mxu0 0.0
      %1840 = vmatpush1.msra.mxu0 0.0
      %1841 = vmatprep.subr.mxu0 0.0
      %1842 = vmatpush1.msra.mxu0 0.0
      %1843 = vmatprep.subr.mxu0 0.0
      %1844 = vmatpush1.msra.mxu0 0.0
      %1845 = vmatprep.subr.mxu0 0.0
      %1846 = vmatpush1.msra.mxu0 0.0
      %1847 = vmatprep.subr.mxu0 0.0
      %1848 = vmatpush1.msra.mxu0 0.0
      %1849 = vmatprep.subr.mxu0 0.0
      %1850 = vmatpush1.msra.mxu0 0.0
      %1851 = vmatprep.subr.mxu0 0.0
      %1852 = vmatpush1.msra.mxu0 0.0
      %1853 = vmatprep.subr.mxu0 0.0
      %1854 = vmatpush1.msra.mxu0 0.0
      %1855 = vmatprep.subr.mxu0 0.0
      %1856 = vmatpush1.msra.mxu0 0.0
      %1857 = vmatprep.subr.mxu0 0.0
      %1858 = vmatpush1.msra.mxu0 0.0
      %1859 = vmatprep.subr.mxu0 0.0
      %1860 = vmatpush1.msra.mxu0 0.0
      %1861 = vmatprep.subr.mxu0 0.0
      %1862 = vmatpush1.msra.mxu0 0.0
      %1863 = vmatprep.subr.mxu0 0.0
      %1864 = vmatpush1.msra.mxu0 0.0
      %1865 = vmatprep.subr.mxu0 0.0
      %1866 = vmatpush1.msra.mxu0 0.0
      %1867 = vmatprep.subr.mxu0 0.0
      %1868 = vmatpush1.msra.mxu0 0.0
      %1869 = vmatprep.subr.mxu0 0.0
      %1870 = vmatpush1.msra.mxu0 0.0
      %1871 = vmatprep.mubr.f32.mxu0 0.0
      %1872 = vmatmul.mubr.f32.gmra.mrb[0].mxu0 %v738
      %v1873 = vpop.f32.mrb[0].mxu0
      %v1874 = vadd.f32 0.0, %v1873
      %v1875 = vpop.f32.mrb[0].mxu0
      %1876 = vmatprep.mubr.f32.mxu0 0.0
      %1877 = vmatmul.mubr.f32.gmra.mrb[0].mxu0 %v739
      %v1878 = vpop.f32.mrb[0].mxu0
      %v1879 = vadd.f32 0.0, %v1878
      %v1880 = vpop.f32.mrb[0].mxu0
      %1881 = vmatprep.mubr.f32.mxu0 0.0
      %1882 = vmatmul.mubr.f32.gmra.mrb[0].mxu0 %v740
      %v1883 = vpop.f32.mrb[0].mxu0
      %v1884 = vadd.f32 0.0, %v1883
      %v1885 = vpop.f32.mrb[0].mxu0
      %1886 = vmatprep.mubr.f32.mxu0 0.0
      %1887 = vmatmul.mubr.f32.gmra.mrb[0].mxu0 %v741
      %v1888 = vpop.f32.mrb[0].mxu0
      %v1889 = vadd.f32 0.0, %v1888
      %v1890 = vpop.f32.mrb[0].mxu0
      %1891 = vmatprep.mubr.f32.mxu0 0.0
      %1892 = vmatmul.mubr.f32.gmra.mrb[0].mxu0 %v742
      %v1893 = vpop.f32.mrb[0].mxu0
      %v1894 = vadd.f32 0.0, %v1893
      %v1895 = vpop.f32.mrb[0].mxu0
      %1896 = vmatprep.mubr.f32.mxu0 0.0
      %1897 = vmatmul.mubr.f32.gmra.mrb[0].mxu0 %v743
      %v1898 = vpop.f32.mrb[0].mxu0
      %v1899 = vadd.f32 0.0, %v1898
      %v1900 = vpop.f32.mrb[0].mxu0
      %1901 = vmatprep.mubr.f32.mxu0 0.0
      %1902 = vmatmul.mubr.f32.gmra.mrb[0].mxu0 %v744
      %v1903 = vpop.f32.mrb[0].mxu0
      %v1904 = vadd.f32 0.0, %v1903
      %v1905 = vpop.f32.mrb[0].mxu0
      %1906 = vmatprep.mubr.f32.mxu0 0.0
      %1907 = vmatmul.mubr.f32.gmra.mrb[0].mxu0 %v745
      %v1908 = vpop.f32.mrb[0].mxu0
      %v1909 = vadd.f32 0.0, %v1908
      %v1910 = vpop.f32.mrb[0].mxu0
      %1911 = vmatprep.mubr.f32.mxu0 0.0
      %1912 = vmatmul.mubr.f32.gmra.mrb[0].mxu0 %v746
      %v1913 = vpop.f32.mrb[0].mxu0
      %v1914 = vadd.f32 0.0, %v1913
      %v1915 = vpop.f32.mrb[0].mxu0
      %1916 = vmatprep.mubr.f32.mxu0 0.0
      %1917 = vmatmul.mubr.f32.gmra.mrb[0].mxu0 %v747
      %v1918 = vpop.f32.mrb[0].mxu0
      %v1919 = vadd.f32 0.0, %v1918
      %v1920 = vpop.f32.mrb[0].mxu0
      %1921 = vmatprep.mubr.f32.mxu0 0.0
      %1922 = vmatmul.mubr.f32.gmra.mrb[0].mxu0 %v748
      %v1923 = vpop.f32.mrb[0].mxu0
      %v1924 = vadd.f32 0.0, %v1923
      %v1925 = vpop.f32.mrb[0].mxu0
      %1926 = vmatprep.mubr.f32.mxu0 0.0
      %1927 = vmatmul.mubr.f32.gmra.mrb[0].mxu0 %v749
      %v1928 = vpop.f32.mrb[0].mxu0
      %v1929 = vadd.f32 0.0, %v1928
      %v1930 = vpop.f32.mrb[0].mxu0
      %1931 = vmatprep.mubr.f32.mxu0 0.0
      %1932 = vmatmul.mubr.f32.gmra.mrb[0].mxu0 %v750
      %v1933 = vpop.f32.mrb[0].mxu0
      %v1934 = vadd.f32 0.0, %v1933
      %v1935 = vpop.f32.mrb[0].mxu0
      %1936 = vmatprep.mubr.f32.mxu0 0.0
      %1937 = vmatmul.mubr.f32.gmra.mrb[0].mxu0 %v751
      %v1938 = vpop.f32.mrb[0].mxu0
      %v1939 = vadd.f32 0.0, %v1938
      %v1940 = vpop.f32.mrb[0].mxu0
      %1941 = vmatprep.mubr.f32.mxu0 0.0
      %1942 = vmatmul.mubr.f32.gmra.mrb[0].mxu0 %v752
      %v1943 = vpop.f32.mrb[0].mxu0
      %v1944 = vadd.f32 0.0, %v1943
      %v1945 = vpop.f32.mrb[0].mxu0
      %1946 = vmatprep.mubr.f32.mxu0 0.0
      %1947 = vmatmul.mubr.f32.gmra.mrb[0].mxu0 %v753
      %v1948 = vpop.f32.mrb[0].mxu0
      %v1949 = vadd.f32 0.0, %v1948
      %v1950 = vpop.f32.mrb[0].mxu0
      %1951 = vdwg.mxu0
      %1952 = vst.msk [vmem:[#allocation2] sm:$0xff] %vm1497, %v1874
      %1953 = vst.msk [vmem:[#allocation2 + $0x8] sm:$0xff] %vm1497, %v1879
      %1954 = vst.msk [vmem:[#allocation2 + $0x10] sm:$0xff] %vm1497, %v1884
      %1955 = vst.msk [vmem:[#allocation2 + $0x18] sm:$0xff] %vm1497, %v1889
      %1956 = vst.msk [vmem:[#allocation2 + $0x20] sm:$0xff] %vm1497, %v1894
      %1957 = vst.msk [vmem:[#allocation2 + $0x28] sm:$0xff] %vm1497, %v1899
      %1958 = vst.msk [vmem:[#allocation2 + $0x30] sm:$0xff] %vm1497, %v1904
      %1959 = vst.msk [vmem:[#allocation2 + $0x38] sm:$0xff] %vm1497, %v1909
      %1960 = vst.msk [vmem:[#allocation2 + $0x40] sm:$0xff] %vm1497, %v1914
      %1961 = vst.msk [vmem:[#allocation2 + $0x48] sm:$0xff] %vm1497, %v1919
      %1962 = vst.msk [vmem:[#allocation2 + $0x50] sm:$0xff] %vm1497, %v1924
      %1963 = vst.msk [vmem:[#allocation2 + $0x58] sm:$0xff] %vm1497, %v1929
      %1964 = vst.msk [vmem:[#allocation2 + $0x60] sm:$0xff] %vm1497, %v1934
      %1965 = vst.msk [vmem:[#allocation2 + $0x68] sm:$0xff] %vm1497, %v1939
      %1966 = vst.msk [vmem:[#allocation2 + $0x70] sm:$0xff] %vm1497, %v1944
      %1967 = vst.msk [vmem:[#allocation2 + $0x78] sm:$0xff] %vm1497, %v1949
      %v1968 = vld [vmem:[#allocation2] sm:$0xff]
      %v1969 = vld [vmem:[#allocation2 + $0x8] sm:$0xff]
      %v1970 = vld [vmem:[#allocation2 + $0x10] sm:$0xff]
      %v1971 = vld [vmem:[#allocation2 + $0x18] sm:$0xff]
      %v1972 = vld [vmem:[#allocation2 + $0x20] sm:$0xff]
      %v1973 = vld [vmem:[#allocation2 + $0x28] sm:$0xff]
      %v1974 = vld [vmem:[#allocation2 + $0x30] sm:$0xff]
      %v1975 = vld [vmem:[#allocation2 + $0x38] sm:$0xff]
      %v1976 = vld [vmem:[#allocation2 + $0x40] sm:$0xff]
      %v1977 = vld [vmem:[#allocation2 + $0x48] sm:$0xff]
      %v1978 = vld [vmem:[#allocation2 + $0x50] sm:$0xff]
      %v1979 = vld [vmem:[#allocation2 + $0x58] sm:$0xff]
      %v1980 = vld [vmem:[#allocation2 + $0x60] sm:$0xff]
      %v1981 = vld [vmem:[#allocation2 + $0x68] sm:$0xff]
      %v1982 = vld [vmem:[#allocation2 + $0x70] sm:$0xff]
      %v1983 = vld [vmem:[#allocation2 + $0x78] sm:$0xff]
      %s1984 = scalar_lea.vmem %s8, 128
      %v1985 = vld [vmem:[%s1984] sm:$0xff]
      %v1986 = vld [vmem:[%s1984 + $0x8] sm:$0xff]
      %v1987 = vld [vmem:[%s1984 + $0x10] sm:$0xff]
      %v1988 = vld [vmem:[%s1984 + $0x18] sm:$0xff]
      %v1989 = vld [vmem:[%s1984 + $0x20] sm:$0xff]
      %v1990 = vld [vmem:[%s1984 + $0x28] sm:$0xff]
      %v1991 = vld [vmem:[%s1984 + $0x30] sm:$0xff]
      %v1992 = vld [vmem:[%s1984 + $0x38] sm:$0xff]
      %v1993 = vld [vmem:[%s1984 + $0x40] sm:$0xff]
      %v1994 = vld [vmem:[%s1984 + $0x48] sm:$0xff]
      %v1995 = vld [vmem:[%s1984 + $0x50] sm:$0xff]
      %v1996 = vld [vmem:[%s1984 + $0x58] sm:$0xff]
      %v1997 = vld [vmem:[%s1984 + $0x60] sm:$0xff]
      %v1998 = vld [vmem:[%s1984 + $0x68] sm:$0xff]
      %v1999 = vld [vmem:[%s1984 + $0x70] sm:$0xff]
      %v2000 = vld [vmem:[%s1984 + $0x78] sm:$0xff]
      %2001 = vmatprep.subr.mxu0 0.0
      %2002 = vmatpush1.msra.mxu0 %v1985
      %2003 = vmatprep.subr.mxu0 0.0
      %2004 = vmatpush1.msra.mxu0 %v1986
      %2005 = vmatprep.subr.mxu0 0.0
      %2006 = vmatpush1.msra.mxu0 %v1987
      %2007 = vmatprep.subr.mxu0 0.0
      %2008 = vmatpush1.msra.mxu0 %v1988
      %2009 = vmatprep.subr.mxu0 0.0
      %2010 = vmatpush1.msra.mxu0 %v1989
      %2011 = vmatprep.subr.mxu0 0.0
      %2012 = vmatpush1.msra.mxu0 %v1990
      %2013 = vmatprep.subr.mxu0 0.0
      %2014 = vmatpush1.msra.mxu0 %v1991
      %2015 = vmatprep.subr.mxu0 0.0
      %2016 = vmatpush1.msra.mxu0 %v1992
      %2017 = vmatprep.subr.mxu0 0.0
      %2018 = vmatpush1.msra.mxu0 %v1993
      %2019 = vmatprep.subr.mxu0 0.0
      %2020 = vmatpush1.msra.mxu0 %v1994
      %2021 = vmatprep.subr.mxu0 0.0
      %2022 = vmatpush1.msra.mxu0 %v1995
      %2023 = vmatprep.subr.mxu0 0.0
      %2024 = vmatpush1.msra.mxu0 %v1996
      %2025 = vmatprep.subr.mxu0 0.0
      %2026 = vmatpush1.msra.mxu0 %v1997
      %2027 = vmatprep.subr.mxu0 0.0
      %2028 = vmatpush1.msra.mxu0 %v1998
      %2029 = vmatprep.subr.mxu0 0.0
      %2030 = vmatpush1.msra.mxu0 %v1999
      %2031 = vmatprep.subr.mxu0 0.0
      %2032 = vmatpush1.msra.mxu0 %v2000
      %2033 = vmatprep.subr.mxu0 0.0
      %2034 = vmatpush1.msra.mxu0 0.0
      %2035 = vmatprep.subr.mxu0 0.0
      %2036 = vmatpush1.msra.mxu0 0.0
      %2037 = vmatprep.subr.mxu0 0.0
      %2038 = vmatpush1.msra.mxu0 0.0
      %2039 = vmatprep.subr.mxu0 0.0
      %2040 = vmatpush1.msra.mxu0 0.0
      %2041 = vmatprep.subr.mxu0 0.0
      %2042 = vmatpush1.msra.mxu0 0.0
      %2043 = vmatprep.subr.mxu0 0.0
      %2044 = vmatpush1.msra.mxu0 0.0
      %2045 = vmatprep.subr.mxu0 0.0
      %2046 = vmatpush1.msra.mxu0 0.0
      %2047 = vmatprep.subr.mxu0 0.0
      %2048 = vmatpush1.msra.mxu0 0.0
      %2049 = vmatprep.subr.mxu0 0.0
      %2050 = vmatpush1.msra.mxu0 0.0
      %2051 = vmatprep.subr.mxu0 0.0
      %2052 = vmatpush1.msra.mxu0 0.0
      %2053 = vmatprep.subr.mxu0 0.0
      %2054 = vmatpush1.msra.mxu0 0.0
      %2055 = vmatprep.subr.mxu0 0.0
      %2056 = vmatpush1.msra.mxu0 0.0
      %2057 = vmatprep.subr.mxu0 0.0
      %2058 = vmatpush1.msra.mxu0 0.0
      %2059 = vmatprep.subr.mxu0 0.0
      %2060 = vmatpush1.msra.mxu0 0.0
      %2061 = vmatprep.subr.mxu0 0.0
      %2062 = vmatpush1.msra.mxu0 0.0
      %2063 = vmatprep.subr.mxu0 0.0
      %2064 = vmatpush1.msra.mxu0 0.0
      %2065 = vmatprep.mubr.f32.mxu0 0.0
      %2066 = vmatmul.mubr.f32.gmra.mrb[0].mxu0 %v1968
      %v2067 = vpop.f32.mrb[0].mxu0
      %v2068 = vadd.f32 0.0, %v2067
      %v2069 = vpop.f32.mrb[0].mxu0
      %2070 = vmatprep.mubr.f32.mxu0 0.0
      %2071 = vmatmul.mubr.f32.gmra.mrb[0].mxu0 %v1969
      %v2072 = vpop.f32.mrb[0].mxu0
      %v2073 = vadd.f32 0.0, %v2072
      %v2074 = vpop.f32.mrb[0].mxu0
      %2075 = vmatprep.mubr.f32.mxu0 0.0
      %2076 = vmatmul.mubr.f32.gmra.mrb[0].mxu0 %v1970
      %v2077 = vpop.f32.mrb[0].mxu0
      %v2078 = vadd.f32 0.0, %v2077
      %v2079 = vpop.f32.mrb[0].mxu0
      %2080 = vmatprep.mubr.f32.mxu0 0.0
      %2081 = vmatmul.mubr.f32.gmra.mrb[0].mxu0 %v1971
      %v2082 = vpop.f32.mrb[0].mxu0
      %v2083 = vadd.f32 0.0, %v2082
      %v2084 = vpop.f32.mrb[0].mxu0
      %2085 = vmatprep.mubr.f32.mxu0 0.0
      %2086 = vmatmul.mubr.f32.gmra.mrb[0].mxu0 %v1972
      %v2087 = vpop.f32.mrb[0].mxu0
      %v2088 = vadd.f32 0.0, %v2087
      %v2089 = vpop.f32.mrb[0].mxu0
      %2090 = vmatprep.mubr.f32.mxu0 0.0
      %2091 = vmatmul.mubr.f32.gmra.mrb[0].mxu0 %v1973
      %v2092 = vpop.f32.mrb[0].mxu0
      %v2093 = vadd.f32 0.0, %v2092
      %v2094 = vpop.f32.mrb[0].mxu0
      %2095 = vmatprep.mubr.f32.mxu0 0.0
      %2096 = vmatmul.mubr.f32.gmra.mrb[0].mxu0 %v1974
      %v2097 = vpop.f32.mrb[0].mxu0
      %v2098 = vadd.f32 0.0, %v2097
      %v2099 = vpop.f32.mrb[0].mxu0
      %2100 = vmatprep.mubr.f32.mxu0 0.0
      %2101 = vmatmul.mubr.f32.gmra.mrb[0].mxu0 %v1975
      %v2102 = vpop.f32.mrb[0].mxu0
      %v2103 = vadd.f32 0.0, %v2102
      %v2104 = vpop.f32.mrb[0].mxu0
      %2105 = vmatprep.mubr.f32.mxu0 0.0
      %2106 = vmatmul.mubr.f32.gmra.mrb[0].mxu0 %v1976
      %v2107 = vpop.f32.mrb[0].mxu0
      %v2108 = vadd.f32 0.0, %v2107
      %v2109 = vpop.f32.mrb[0].mxu0
      %2110 = vmatprep.mubr.f32.mxu0 0.0
      %2111 = vmatmul.mubr.f32.gmra.mrb[0].mxu0 %v1977
      %v2112 = vpop.f32.mrb[0].mxu0
      %v2113 = vadd.f32 0.0, %v2112
      %v2114 = vpop.f32.mrb[0].mxu0
      %2115 = vmatprep.mubr.f32.mxu0 0.0
      %2116 = vmatmul.mubr.f32.gmra.mrb[0].mxu0 %v1978
      %v2117 = vpop.f32.mrb[0].mxu0
      %v2118 = vadd.f32 0.0, %v2117
      %v2119 = vpop.f32.mrb[0].mxu0
      %2120 = vmatprep.mubr.f32.mxu0 0.0
      %2121 = vmatmul.mubr.f32.gmra.mrb[0].mxu0 %v1979
      %v2122 = vpop.f32.mrb[0].mxu0
      %v2123 = vadd.f32 0.0, %v2122
      %v2124 = vpop.f32.mrb[0].mxu0
      %2125 = vmatprep.mubr.f32.mxu0 0.0
      %2126 = vmatmul.mubr.f32.gmra.mrb[0].mxu0 %v1980
      %v2127 = vpop.f32.mrb[0].mxu0
      %v2128 = vadd.f32 0.0, %v2127
      %v2129 = vpop.f32.mrb[0].mxu0
      %2130 = vmatprep.mubr.f32.mxu0 0.0
      %2131 = vmatmul.mubr.f32.gmra.mrb[0].mxu0 %v1981
      %v2132 = vpop.f32.mrb[0].mxu0
      %v2133 = vadd.f32 0.0, %v2132
      %v2134 = vpop.f32.mrb[0].mxu0
      %2135 = vmatprep.mubr.f32.mxu0 0.0
      %2136 = vmatmul.mubr.f32.gmra.mrb[0].mxu0 %v1982
      %v2137 = vpop.f32.mrb[0].mxu0
      %v2138 = vadd.f32 0.0, %v2137
      %v2139 = vpop.f32.mrb[0].mxu0
      %2140 = vmatprep.mubr.f32.mxu0 0.0
      %2141 = vmatmul.mubr.f32.gmra.mrb[0].mxu0 %v1983
      %v2142 = vpop.f32.mrb[0].mxu0
      %v2143 = vadd.f32 0.0, %v2142
      %v2144 = vpop.f32.mrb[0].mxu0
      %2145 = vdwg.mxu0
      %v2146 = vmul.f32 %v1874, 0.9
      %v2147 = vmul.f32 %v1879, 0.9
      %v2148 = vmul.f32 %v1884, 0.9
      %v2149 = vmul.f32 %v1889, 0.9
      %v2150 = vmul.f32 %v1894, 0.9
      %v2151 = vmul.f32 %v1899, 0.9
      %v2152 = vmul.f32 %v1904, 0.9
      %v2153 = vmul.f32 %v1909, 0.9
      %v2154 = vmul.f32 %v1914, 0.9
      %v2155 = vmul.f32 %v1919, 0.9
      %v2156 = vmul.f32 %v1924, 0.9
      %v2157 = vmul.f32 %v1929, 0.9
      %v2158 = vmul.f32 %v1934, 0.9
      %v2159 = vmul.f32 %v1939, 0.9
      %v2160 = vmul.f32 %v1944, 0.9
      %v2161 = vmul.f32 %v1949, 0.9
      %v2162 = vadd.f32 %v2146, %v1707
      %v2163 = vadd.f32 %v2147, %v1708
      %v2164 = vadd.f32 %v2148, %v1709
      %v2165 = vadd.f32 %v2149, %v1710
      %v2166 = vadd.f32 %v2150, %v1711
      %v2167 = vadd.f32 %v2151, %v1712
      %v2168 = vadd.f32 %v2152, %v1713
      %v2169 = vadd.f32 %v2153, %v1714
      %v2170 = vadd.f32 %v2154, %v1715
      %v2171 = vadd.f32 %v2155, %v1716
      %v2172 = vadd.f32 %v2156, %v1717
      %v2173 = vadd.f32 %v2157, %v1718
      %v2174 = vadd.f32 %v2158, %v1719
      %v2175 = vadd.f32 %v2159, %v1720
      %v2176 = vadd.f32 %v2160, %v1721
      %v2177 = vadd.f32 %v2161, %v1722
      %v2178 = vstv %s1806
      %v2179 = vmul.f32 %v2178, %v2068
      %v2180 = vmul.f32 %v2178, %v2073
      %v2181 = vmul.f32 %v2178, %v2078
      %v2182 = vmul.f32 %v2178, %v2083
      %v2183 = vmul.f32 %v2178, %v2088
      %v2184 = vmul.f32 %v2178, %v2093
      %v2185 = vmul.f32 %v2178, %v2098
      %v2186 = vmul.f32 %v2178, %v2103
      %v2187 = vmul.f32 %v2178, %v2108
      %v2188 = vmul.f32 %v2178, %v2113
      %v2189 = vmul.f32 %v2178, %v2118
      %v2190 = vmul.f32 %v2178, %v2123
      %v2191 = vmul.f32 %v2178, %v2128
      %v2192 = vmul.f32 %v2178, %v2133
      %v2193 = vmul.f32 %v2178, %v2138
      %v2194 = vmul.f32 %v2178, %v2143
      %s2195 = ssub.f32 1.0, %s1806
      %v2196 = vstv %s2195
      %v2197 = vmul.f32 %v2196, %v2162
      %v2198 = vmul.f32 %v2196, %v2163
      %v2199 = vmul.f32 %v2196, %v2164
      %v2200 = vmul.f32 %v2196, %v2165
      %v2201 = vmul.f32 %v2196, %v2166
      %v2202 = vmul.f32 %v2196, %v2167
      %v2203 = vmul.f32 %v2196, %v2168
      %v2204 = vmul.f32 %v2196, %v2169
      %v2205 = vmul.f32 %v2196, %v2170
      %v2206 = vmul.f32 %v2196, %v2171
      %v2207 = vmul.f32 %v2196, %v2172
      %v2208 = vmul.f32 %v2196, %v2173
      %v2209 = vmul.f32 %v2196, %v2174
      %v2210 = vmul.f32 %v2196, %v2175
      %v2211 = vmul.f32 %v2196, %v2176
      %v2212 = vmul.f32 %v2196, %v2177
      %v2213 = vadd.f32 %v2179, %v2197
      %v2214 = vadd.f32 %v2180, %v2198
      %v2215 = vadd.f32 %v2181, %v2199
      %v2216 = vadd.f32 %v2182, %v2200
      %v2217 = vadd.f32 %v2183, %v2201
      %v2218 = vadd.f32 %v2184, %v2202
      %v2219 = vadd.f32 %v2185, %v2203
      %v2220 = vadd.f32 %v2186, %v2204
      %v2221 = vadd.f32 %v2187, %v2205
      %v2222 = vadd.f32 %v2188, %v2206
      %v2223 = vadd.f32 %v2189, %v2207
      %v2224 = vadd.f32 %v2190, %v2208
      %v2225 = vadd.f32 %v2191, %v2209
      %v2226 = vadd.f32 %v2192, %v2210
      %v2227 = vadd.f32 %v2193, %v2211
      %v2228 = vadd.f32 %v2194, %v2212
      %v2229 = vmax.f32 %v2213, 0.0
      %v2230 = vmax.f32 %v2214, 0.0
      %v2231 = vmax.f32 %v2215, 0.0
      %v2232 = vmax.f32 %v2216, 0.0
      %v2233 = vmax.f32 %v2217, 0.0
      %v2234 = vmax.f32 %v2218, 0.0
      %v2235 = vmax.f32 %v2219, 0.0
      %v2236 = vmax.f32 %v2220, 0.0
      %v2237 = vmax.f32 %v2221, 0.0
      %v2238 = vmax.f32 %v2222, 0.0
      %v2239 = vmax.f32 %v2223, 0.0
      %v2240 = vmax.f32 %v2224, 0.0
      %v2241 = vmax.f32 %v2225, 0.0
      %v2242 = vmax.f32 %v2226, 0.0
      %v2243 = vmax.f32 %v2227, 0.0
      %v2244 = vmax.f32 %v2228, 0.0
      %v2245 = vld [vmem:[%s9] sm:$0xff]
      %v2246 = vld [vmem:[%s9 + $0x8] sm:$0xff]
      %v2247 = vld [vmem:[%s9 + $0x10] sm:$0xff]
      %v2248 = vld [vmem:[%s9 + $0x18] sm:$0xff]
      %v2249 = vld [vmem:[%s9 + $0x20] sm:$0xff]
      %v2250 = vld [vmem:[%s9 + $0x28] sm:$0xff]
      %v2251 = vld [vmem:[%s9 + $0x30] sm:$0xff]
      %v2252 = vld [vmem:[%s9 + $0x38] sm:$0xff]
      %v2253 = vld [vmem:[%s10] sm:$0x1]
      %v2255 = vlaneseq
      %v2256 = vshrl.u32 %v2255, 7
      %v2257 = vsub.s32 0, %v2256
      %v2258 = vrot.slane %v2253, %v2257
      %v2261 = vsel %vm1497, %v2229, 0
      %v2264 = vsel %vm1497, %v2230, 0
      %v2267 = vsel %vm1497, %v2231, 0
      %v2270 = vsel %vm1497, %v2232, 0
      %v2273 = vsel %vm1497, %v2233, 0
      %v2276 = vsel %vm1497, %v2234, 0
      %v2279 = vsel %vm1497, %v2235, 0
      %v2282 = vsel %vm1497, %v2236, 0
      %v2285 = vsel %vm1497, %v2237, 0
      %v2288 = vsel %vm1497, %v2238, 0
      %v2291 = vsel %vm1497, %v2239, 0
      %v2294 = vsel %vm1497, %v2240, 0
      %v2297 = vsel %vm1497, %v2241, 0
      %v2300 = vsel %vm1497, %v2242, 0
      %v2303 = vsel %vm1497, %v2243, 0
      %v2306 = vsel %vm1497, %v2244, 0
      %2308 = vmatprep.subr.mxu0 0.0
      %2309 = vmatpush1.msra.mxu0 %v2245
      %2310 = vmatprep.subr.mxu0 0.0
      %2311 = vmatpush1.msra.mxu0 %v2246
      %2312 = vmatprep.subr.mxu0 0.0
      %2313 = vmatpush1.msra.mxu0 %v2247
      %2314 = vmatprep.subr.mxu0 0.0
      %2315 = vmatpush1.msra.mxu0 %v2248
      %2316 = vmatprep.subr.mxu0 0.0
      %2317 = vmatpush1.msra.mxu0 %v2249
      %2318 = vmatprep.subr.mxu0 0.0
      %2319 = vmatpush1.msra.mxu0 %v2250
      %2320 = vmatprep.subr.mxu0 0.0
      %2321 = vmatpush1.msra.mxu0 %v2251
      %2322 = vmatprep.subr.mxu0 0.0
      %2323 = vmatpush1.msra.mxu0 %v2252
      %2324 = vmatprep.subr.mxu0 0.0
      %2325 = vmatpush1.msra.mxu0 0.0
      %2326 = vmatprep.subr.mxu0 0.0
      %2327 = vmatpush1.msra.mxu0 0.0
      %2328 = vmatprep.subr.mxu0 0.0
      %2329 = vmatpush1.msra.mxu0 0.0
      %2330 = vmatprep.subr.mxu0 0.0
      %2331 = vmatpush1.msra.mxu0 0.0
      %2332 = vmatprep.subr.mxu0 0.0
      %2333 = vmatpush1.msra.mxu0 0.0
      %2334 = vmatprep.subr.mxu0 0.0
      %2335 = vmatpush1.msra.mxu0 0.0
      %2336 = vmatprep.subr.mxu0 0.0
      %2337 = vmatpush1.msra.mxu0 0.0
      %2338 = vmatprep.subr.mxu0 0.0
      %2339 = vmatpush1.msra.mxu0 0.0
      %2340 = vmatprep.subr.mxu0 0.0
      %2341 = vmatpush1.msra.mxu0 0.0
      %2342 = vmatprep.subr.mxu0 0.0
      %2343 = vmatpush1.msra.mxu0 0.0
      %2344 = vmatprep.subr.mxu0 0.0
      %2345 = vmatpush1.msra.mxu0 0.0
      %2346 = vmatprep.subr.mxu0 0.0
      %2347 = vmatpush1.msra.mxu0 0.0
      %2348 = vmatprep.subr.mxu0 0.0
      %2349 = vmatpush1.msra.mxu0 0.0
      %2350 = vmatprep.subr.mxu0 0.0
      %2351 = vmatpush1.msra.mxu0 0.0
      %2352 = vmatprep.subr.mxu0 0.0
      %2353 = vmatpush1.msra.mxu0 0.0
      %2354 = vmatprep.subr.mxu0 0.0
      %2355 = vmatpush1.msra.mxu0 0.0
      %2356 = vmatprep.subr.mxu0 0.0
      %2357 = vmatpush1.msra.mxu0 0.0
      %2358 = vmatprep.subr.mxu0 0.0
      %2359 = vmatpush1.msra.mxu0 0.0
      %2360 = vmatprep.subr.mxu0 0.0
      %2361 = vmatpush1.msra.mxu0 0.0
      %2362 = vmatprep.subr.mxu0 0.0
      %2363 = vmatpush1.msra.mxu0 0.0
      %2364 = vmatprep.subr.mxu0 0.0
      %2365 = vmatpush1.msra.mxu0 0.0
      %2366 = vmatprep.subr.mxu0 0.0
      %2367 = vmatpush1.msra.mxu0 0.0
      %2368 = vmatprep.subr.mxu0 0.0
      %2369 = vmatpush1.msra.mxu0 0.0
      %2370 = vmatprep.subr.mxu0 0.0
      %2371 = vmatpush1.msra.mxu0 0.0
      %2372 = vmatprep.mubr.f32.mxu0 0.0
      %2373 = vmatmul.mubr.f32.gmra.mrb[0].mxu0 %v2261
      %v2374 = vpop.f32.mrb[0].mxu0
      %v2375 = vadd.f32 %v2258, %v2374
      %v2376 = vpop.f32.mrb[0].mxu0
      %2377 = vmatprep.mubr.f32.mxu0 0.0
      %2378 = vmatmul.mubr.f32.gmra.mrb[0].mxu0 %v2264
      %v2379 = vpop.f32.mrb[0].mxu0
      %v2380 = vadd.f32 %v2258, %v2379
      %v2381 = vpop.f32.mrb[0].mxu0
      %2382 = vmatprep.mubr.f32.mxu0 0.0
      %2383 = vmatmul.mubr.f32.gmra.mrb[0].mxu0 %v2267
      %v2384 = vpop.f32.mrb[0].mxu0
      %v2385 = vadd.f32 %v2258, %v2384
      %v2386 = vpop.f32.mrb[0].mxu0
      %2387 = vmatprep.mubr.f32.mxu0 0.0
      %2388 = vmatmul.mubr.f32.gmra.mrb[0].mxu0 %v2270
      %v2389 = vpop.f32.mrb[0].mxu0
      %v2390 = vadd.f32 %v2258, %v2389
      %v2391 = vpop.f32.mrb[0].mxu0
      %2392 = vmatprep.mubr.f32.mxu0 0.0
      %2393 = vmatmul.mubr.f32.gmra.mrb[0].mxu0 %v2273
      %v2394 = vpop.f32.mrb[0].mxu0
      %v2395 = vadd.f32 %v2258, %v2394
      %v2396 = vpop.f32.mrb[0].mxu0
      %2397 = vmatprep.mubr.f32.mxu0 0.0
      %2398 = vmatmul.mubr.f32.gmra.mrb[0].mxu0 %v2276
      %v2399 = vpop.f32.mrb[0].mxu0
      %v2400 = vadd.f32 %v2258, %v2399
      %v2401 = vpop.f32.mrb[0].mxu0
      %2402 = vmatprep.mubr.f32.mxu0 0.0
      %2403 = vmatmul.mubr.f32.gmra.mrb[0].mxu0 %v2279
      %v2404 = vpop.f32.mrb[0].mxu0
      %v2405 = vadd.f32 %v2258, %v2404
      %v2406 = vpop.f32.mrb[0].mxu0
      %2407 = vmatprep.mubr.f32.mxu0 0.0
      %2408 = vmatmul.mubr.f32.gmra.mrb[0].mxu0 %v2282
      %v2409 = vpop.f32.mrb[0].mxu0
      %v2410 = vadd.f32 %v2258, %v2409
      %v2411 = vpop.f32.mrb[0].mxu0
      %2412 = vmatprep.mubr.f32.mxu0 0.0
      %2413 = vmatmul.mubr.f32.gmra.mrb[0].mxu0 %v2285
      %v2414 = vpop.f32.mrb[0].mxu0
      %v2415 = vadd.f32 %v2258, %v2414
      %v2416 = vpop.f32.mrb[0].mxu0
      %2417 = vmatprep.mubr.f32.mxu0 0.0
      %2418 = vmatmul.mubr.f32.gmra.mrb[0].mxu0 %v2288
      %v2419 = vpop.f32.mrb[0].mxu0
      %v2420 = vadd.f32 %v2258, %v2419
      %v2421 = vpop.f32.mrb[0].mxu0
      %2422 = vmatprep.mubr.f32.mxu0 0.0
      %2423 = vmatmul.mubr.f32.gmra.mrb[0].mxu0 %v2291
      %v2424 = vpop.f32.mrb[0].mxu0
      %v2425 = vadd.f32 %v2258, %v2424
      %v2426 = vpop.f32.mrb[0].mxu0
      %2427 = vmatprep.mubr.f32.mxu0 0.0
      %2428 = vmatmul.mubr.f32.gmra.mrb[0].mxu0 %v2294
      %v2429 = vpop.f32.mrb[0].mxu0
      %v2430 = vadd.f32 %v2258, %v2429
      %v2431 = vpop.f32.mrb[0].mxu0
      %2432 = vmatprep.mubr.f32.mxu0 0.0
      %2433 = vmatmul.mubr.f32.gmra.mrb[0].mxu0 %v2297
      %v2434 = vpop.f32.mrb[0].mxu0
      %v2435 = vadd.f32 %v2258, %v2434
      %v2436 = vpop.f32.mrb[0].mxu0
      %2437 = vmatprep.mubr.f32.mxu0 0.0
      %2438 = vmatmul.mubr.f32.gmra.mrb[0].mxu0 %v2300
      %v2439 = vpop.f32.mrb[0].mxu0
      %v2440 = vadd.f32 %v2258, %v2439
      %v2441 = vpop.f32.mrb[0].mxu0
      %2442 = vmatprep.mubr.f32.mxu0 0.0
      %2443 = vmatmul.mubr.f32.gmra.mrb[0].mxu0 %v2303
      %v2444 = vpop.f32.mrb[0].mxu0
      %v2445 = vadd.f32 %v2258, %v2444
      %v2446 = vpop.f32.mrb[0].mxu0
      %2447 = vmatprep.mubr.f32.mxu0 0.0
      %2448 = vmatmul.mubr.f32.gmra.mrb[0].mxu0 %v2306
      %v2449 = vpop.f32.mrb[0].mxu0
      %v2450 = vadd.f32 %v2258, %v2449
      %v2451 = vpop.f32.mrb[0].mxu0
      %2452 = vdwg.mxu0
      %vm2453 = vcmask 64512
      %v2454 = vsel %vm2453, %v2375, -inf
      %2455 = vmax.xlane.f32.xlu0 %v2454
      %v2456 = vpop.xlane.xlu0 %2455
      %v2457 = vsel %vm2453, %v2380, -inf
      %2458 = vmax.xlane.f32.xlu0 %v2457
      %v2459 = vpop.xlane.xlu0 %2458
      %v2460 = vsel %vm2453, %v2385, -inf
      %2461 = vmax.xlane.f32.xlu0 %v2460
      %v2462 = vpop.xlane.xlu0 %2461
      %v2463 = vsel %vm2453, %v2390, -inf
      %2464 = vmax.xlane.f32.xlu0 %v2463
      %v2465 = vpop.xlane.xlu0 %2464
      %v2466 = vsel %vm2453, %v2395, -inf
      %2467 = vmax.xlane.f32.xlu0 %v2466
      %v2468 = vpop.xlane.xlu0 %2467
      %v2469 = vsel %vm2453, %v2400, -inf
      %2470 = vmax.xlane.f32.xlu0 %v2469
      %v2471 = vpop.xlane.xlu0 %2470
      %v2472 = vsel %vm2453, %v2405, -inf
      %2473 = vmax.xlane.f32.xlu0 %v2472
      %v2474 = vpop.xlane.xlu0 %2473
      %v2475 = vsel %vm2453, %v2410, -inf
      %2476 = vmax.xlane.f32.xlu0 %v2475
      %v2477 = vpop.xlane.xlu0 %2476
      %v2478 = vsel %vm2453, %v2415, -inf
      %2479 = vmax.xlane.f32.xlu0 %v2478
      %v2480 = vpop.xlane.xlu0 %2479
      %v2481 = vsel %vm2453, %v2420, -inf
      %2482 = vmax.xlane.f32.xlu0 %v2481
      %v2483 = vpop.xlane.xlu0 %2482
      %v2484 = vsel %vm2453, %v2425, -inf
      %2485 = vmax.xlane.f32.xlu0 %v2484
      %v2486 = vpop.xlane.xlu0 %2485
      %v2487 = vsel %vm2453, %v2430, -inf
      %2488 = vmax.xlane.f32.xlu0 %v2487
      %v2489 = vpop.xlane.xlu0 %2488
      %v2490 = vsel %vm2453, %v2435, -inf
      %2491 = vmax.xlane.f32.xlu0 %v2490
      %v2492 = vpop.xlane.xlu0 %2491
      %v2493 = vsel %vm2453, %v2440, -inf
      %2494 = vmax.xlane.f32.xlu0 %v2493
      %v2495 = vpop.xlane.xlu0 %2494
      %v2496 = vsel %vm2453, %v2445, -inf
      %2497 = vmax.xlane.f32.xlu0 %v2496
      %v2498 = vpop.xlane.xlu0 %2497
      %v2499 = vsel %vm2453, %v2450, -inf
      %2500 = vmax.xlane.f32.xlu0 %v2499
      %v2501 = vpop.xlane.xlu0 %2500
      %v2502 = vsub.f32 %v2375, %v2456
      %v2503 = vsub.f32 %v2380, %v2459
      %v2504 = vsub.f32 %v2385, %v2462
      %v2505 = vsub.f32 %v2390, %v2465
      %v2506 = vsub.f32 %v2395, %v2468
      %v2507 = vsub.f32 %v2400, %v2471
      %v2508 = vsub.f32 %v2405, %v2474
      %v2509 = vsub.f32 %v2410, %v2477
      %v2510 = vsub.f32 %v2415, %v2480
      %v2511 = vsub.f32 %v2420, %v2483
      %v2512 = vsub.f32 %v2425, %v2486
      %v2513 = vsub.f32 %v2430, %v2489
      %v2514 = vsub.f32 %v2435, %v2492
      %v2515 = vsub.f32 %v2440, %v2495
      %v2516 = vsub.f32 %v2445, %v2498
      %v2517 = vsub.f32 %v2450, %v2501
      %v2518 = vmul.f32 %v2502, 1.442695
      %v2519 = vpow.pop %v2518
      %v2520 = vmul.f32 %v2503, 1.442695
      %v2521 = vpow.pop %v2520
      %v2522 = vmul.f32 %v2504, 1.442695
      %v2523 = vpow.pop %v2522
      %v2524 = vmul.f32 %v2505, 1.442695
      %v2525 = vpow.pop %v2524
      %v2526 = vmul.f32 %v2506, 1.442695
      %v2527 = vpow.pop %v2526
      %v2528 = vmul.f32 %v2507, 1.442695
      %v2529 = vpow.pop %v2528
      %v2530 = vmul.f32 %v2508, 1.442695
      %v2531 = vpow.pop %v2530
      %v2532 = vmul.f32 %v2509, 1.442695
      %v2533 = vpow.pop %v2532
      %v2534 = vmul.f32 %v2510, 1.442695
      %v2535 = vpow.pop %v2534
      %v2536 = vmul.f32 %v2511, 1.442695
      %v2537 = vpow.pop %v2536
      %v2538 = vmul.f32 %v2512, 1.442695
      %v2539 = vpow.pop %v2538
      %v2540 = vmul.f32 %v2513, 1.442695
      %v2541 = vpow.pop %v2540
      %v2542 = vmul.f32 %v2514, 1.442695
      %v2543 = vpow.pop %v2542
      %v2544 = vmul.f32 %v2515, 1.442695
      %v2545 = vpow.pop %v2544
      %v2546 = vmul.f32 %v2516, 1.442695
      %v2547 = vpow.pop %v2546
      %v2548 = vmul.f32 %v2517, 1.442695
      %v2549 = vpow.pop %v2548
      %v2550 = vsel %vm2453, %v2519, 0.0
      %2551 = vadd.xlane.f32.xlu0 %v2550
      %v2552 = vpop.xlane.xlu0 %2551
      %v2553 = vsel %vm2453, %v2521, 0.0
      %2554 = vadd.xlane.f32.xlu0 %v2553
      %v2555 = vpop.xlane.xlu0 %2554
      %v2556 = vsel %vm2453, %v2523, 0.0
      %2557 = vadd.xlane.f32.xlu0 %v2556
      %v2558 = vpop.xlane.xlu0 %2557
      %v2559 = vsel %vm2453, %v2525, 0.0
      %2560 = vadd.xlane.f32.xlu0 %v2559
      %v2561 = vpop.xlane.xlu0 %2560
      %v2562 = vsel %vm2453, %v2527, 0.0
      %2563 = vadd.xlane.f32.xlu0 %v2562
      %v2564 = vpop.xlane.xlu0 %2563
      %v2565 = vsel %vm2453, %v2529, 0.0
      %2566 = vadd.xlane.f32.xlu0 %v2565
      %v2567 = vpop.xlane.xlu0 %2566
      %v2568 = vsel %vm2453, %v2531, 0.0
      %2569 = vadd.xlane.f32.xlu0 %v2568
      %v2570 = vpop.xlane.xlu0 %2569
      %v2571 = vsel %vm2453, %v2533, 0.0
      %2572 = vadd.xlane.f32.xlu0 %v2571
      %v2573 = vpop.xlane.xlu0 %2572
      %v2574 = vsel %vm2453, %v2535, 0.0
      %2575 = vadd.xlane.f32.xlu0 %v2574
      %v2576 = vpop.xlane.xlu0 %2575
      %v2577 = vsel %vm2453, %v2537, 0.0
      %2578 = vadd.xlane.f32.xlu0 %v2577
      %v2579 = vpop.xlane.xlu0 %2578
      %v2580 = vsel %vm2453, %v2539, 0.0
      %2581 = vadd.xlane.f32.xlu0 %v2580
      %v2582 = vpop.xlane.xlu0 %2581
      %v2583 = vsel %vm2453, %v2541, 0.0
      %2584 = vadd.xlane.f32.xlu0 %v2583
      %v2585 = vpop.xlane.xlu0 %2584
      %v2586 = vsel %vm2453, %v2543, 0.0
      %2587 = vadd.xlane.f32.xlu0 %v2586
      %v2588 = vpop.xlane.xlu0 %2587
      %v2589 = vsel %vm2453, %v2545, 0.0
      %2590 = vadd.xlane.f32.xlu0 %v2589
      %v2591 = vpop.xlane.xlu0 %2590
      %v2592 = vsel %vm2453, %v2547, 0.0
      %2593 = vadd.xlane.f32.xlu0 %v2592
      %v2594 = vpop.xlane.xlu0 %2593
      %v2595 = vsel %vm2453, %v2549, 0.0
      %2596 = vadd.xlane.f32.xlu0 %v2595
      %v2597 = vpop.xlane.xlu0 %2596
      %v2598 = vlog2.pop %v2552
      %v2599 = vmul.f32 %v2598, 0.6931472
      %v2600 = vlog2.pop %v2555
      %v2601 = vmul.f32 %v2600, 0.6931472
      %v2602 = vlog2.pop %v2558
      %v2603 = vmul.f32 %v2602, 0.6931472
      %v2604 = vlog2.pop %v2561
      %v2605 = vmul.f32 %v2604, 0.6931472
      %v2606 = vlog2.pop %v2564
      %v2607 = vmul.f32 %v2606, 0.6931472
      %v2608 = vlog2.pop %v2567
      %v2609 = vmul.f32 %v2608, 0.6931472
      %v2610 = vlog2.pop %v2570
      %v2611 = vmul.f32 %v2610, 0.6931472
      %v2612 = vlog2.pop %v2573
      %v2613 = vmul.f32 %v2612, 0.6931472
      %v2614 = vlog2.pop %v2576
      %v2615 = vmul.f32 %v2614, 0.6931472
      %v2616 = vlog2.pop %v2579
      %v2617 = vmul.f32 %v2616, 0.6931472
      %v2618 = vlog2.pop %v2582
      %v2619 = vmul.f32 %v2618, 0.6931472
      %v2620 = vlog2.pop %v2585
      %v2621 = vmul.f32 %v2620, 0.6931472
      %v2622 = vlog2.pop %v2588
      %v2623 = vmul.f32 %v2622, 0.6931472
      %v2624 = vlog2.pop %v2591
      %v2625 = vmul.f32 %v2624, 0.6931472
      %v2626 = vlog2.pop %v2594
      %v2627 = vmul.f32 %v2626, 0.6931472
      %v2628 = vlog2.pop %v2597
      %v2629 = vmul.f32 %v2628, 0.6931472
      %v2630 = vadd.f32 %v2599, %v2456
      %v2631 = vadd.f32 %v2601, %v2459
      %v2632 = vadd.f32 %v2603, %v2462
      %v2633 = vadd.f32 %v2605, %v2465
      %v2634 = vadd.f32 %v2607, %v2468
      %v2635 = vadd.f32 %v2609, %v2471
      %v2636 = vadd.f32 %v2611, %v2474
      %v2637 = vadd.f32 %v2613, %v2477
      %v2638 = vadd.f32 %v2615, %v2480
      %v2639 = vadd.f32 %v2617, %v2483
      %v2640 = vadd.f32 %v2619, %v2486
      %v2641 = vadd.f32 %v2621, %v2489
      %v2642 = vadd.f32 %v2623, %v2492
      %v2643 = vadd.f32 %v2625, %v2495
      %v2644 = vadd.f32 %v2627, %v2498
      %v2645 = vadd.f32 %v2629, %v2501
      %v2646 = vsub.f32 %v2375, %v2630
      %v2647 = vsub.f32 %v2380, %v2631
      %v2648 = vsub.f32 %v2385, %v2632
      %v2649 = vsub.f32 %v2390, %v2633
      %v2650 = vsub.f32 %v2395, %v2634
      %v2651 = vsub.f32 %v2400, %v2635
      %v2652 = vsub.f32 %v2405, %v2636
      %v2653 = vsub.f32 %v2410, %v2637
      %v2654 = vsub.f32 %v2415, %v2638
      %v2655 = vsub.f32 %v2420, %v2639
      %v2656 = vsub.f32 %v2425, %v2640
      %v2657 = vsub.f32 %v2430, %v2641
      %v2658 = vsub.f32 %v2435, %v2642
      %v2659 = vsub.f32 %v2440, %v2643
      %v2660 = vsub.f32 %v2445, %v2644
      %v2661 = vsub.f32 %v2450, %v2645
      %2662 = vst.msk [vmem:[%s406] sm:$0xff] %vm2453, %v2646
      %2663 = vst.msk [vmem:[%s406 + $0x8] sm:$0xff] %vm2453, %v2647
      %2664 = vst.msk [vmem:[%s406 + $0x10] sm:$0xff] %vm2453, %v2648
      %2665 = vst.msk [vmem:[%s406 + $0x18] sm:$0xff] %vm2453, %v2649
      %2666 = vst.msk [vmem:[%s406 + $0x20] sm:$0xff] %vm2453, %v2650
      %2667 = vst.msk [vmem:[%s406 + $0x28] sm:$0xff] %vm2453, %v2651
      %2668 = vst.msk [vmem:[%s406 + $0x30] sm:$0xff] %vm2453, %v2652
      %2669 = vst.msk [vmem:[%s406 + $0x38] sm:$0xff] %vm2453, %v2653
      %2670 = vst.msk [vmem:[%s406 + $0x40] sm:$0xff] %vm2453, %v2654
      %2671 = vst.msk [vmem:[%s406 + $0x48] sm:$0xff] %vm2453, %v2655
      %2672 = vst.msk [vmem:[%s406 + $0x50] sm:$0xff] %vm2453, %v2656
      %2673 = vst.msk [vmem:[%s406 + $0x58] sm:$0xff] %vm2453, %v2657
      %2674 = vst.msk [vmem:[%s406 + $0x60] sm:$0xff] %vm2453, %v2658
      %2675 = vst.msk [vmem:[%s406 + $0x68] sm:$0xff] %vm2453, %v2659
      %2676 = vst.msk [vmem:[%s406 + $0x70] sm:$0xff] %vm2453, %v2660
      %2677 = vst.msk [vmem:[%s406 + $0x78] sm:$0xff] %vm2453, %v2661
      %p2678 = scmp.lt.s32.totalorder %s28, 1
      %s2679 = scalar_select %p2678, %s28, 1
      %s2680 = smul.addr %s2679, 16
      %s2681 = smul.addr %s2680, 8
      %s2682 = scalar_lea.vmem %s11, %s2681
      // Predicated region
      $region61: #{tpu_custom_call.1} parent=59 // pred_check
        %p2683 = pneg %p271
      $region62: #{tpu_custom_call.1} parent=59 // pred_check_branch
        %2685 = sbr.rel (%p2683) target = $region64
      $region63: #{tpu_custom_call.1} parent=59 // pred_region
        _
      $region64: #{tpu_custom_call.1} parent=59 // pred_fallthru
        _
    $region60: #{tpu_custom_call.1} parent=5 // pred_fallthru
      _
    %p2686 = scmp.le.s32.totalorder 2, %s23
    // Predicated region
    $region65: #{tpu_custom_call.1} parent=5 // pred_check
      %p2687 = pneg %p2686
    $region66: #{tpu_custom_call.1} parent=5 // pred_check_branch
      %2689 = sbr.rel (%p2687) target = $region68
    $region67: #{tpu_custom_call.1} parent=5 // pred_region
      %s2690 = ssub.s32 %s23, 2
      // Predicated region
      $region69: #{tpu_custom_call.1} parent=67 // pred_check
        %p2691 = pneg %p277
      $region70: #{tpu_custom_call.1} parent=67 // pred_check_branch
        %2693 = sbr.rel (%p2691) target = $region72
      $region71: #{tpu_custom_call.1} parent=67 // pred_region
        %p2694 = scmp.lt.s32.totalorder %s29, 1
        %s2695 = scalar_select %p2694, %s29, 1
        %s2696 = smul.addr %s2695, 16
        %s2697 = smul.addr %s2696, 8
        %s2698 = scalar_lea.vmem %s11, %s2697
      $region72: #{tpu_custom_call.1} parent=67 // pred_fallthru
        _
    $region68: #{tpu_custom_call.1} parent=5 // pred_fallthru
      _
  $region6: #{tpu_custom_call.1} parent=0 // loop_footer
    %s27 = sadd.s32 1, %s23
  $region7: #{tpu_custom_call.1} parent=0 // loop_footer_branch
    %22 = sbr.rel target = $region3
  $region8: #{tpu_custom_call.1} parent=0 // loop_exit
    _

</llo_original>
